<compile_context>
chip_gen: v7x
topology: tpu7x:2x2x1
jax: 0.10.0
libtpu: 0.0.40
codegen_flags: <defaults>
</compile_context>

<pallas_src>
import functools
import math

import jax
import jax.numpy as jnp
from jax import lax
from jax.experimental import pallas as pl
from jax.experimental.pallas import tpu as pltpu

MXU_DTYPE = jnp.bfloat16
VMEM_LIMIT = 32 * 1024 * 1024


def _dot(a, b):
    """MXU matmul with bf16 inputs and f32 accumulation."""
    return jnp.dot(a.astype(MXU_DTYPE), b.astype(MXU_DTYPE),
                   preferred_element_type=jnp.float32)


# ----------------------------- Pallas kernels -----------------------------

def _embed_pe_kernel(x_ref, w_ref, peb_ref, o_ref):
    """Fused: embedding matmul + (bias + positional encoding) for one batch."""
    o_ref[0] = (_dot(x_ref[0], w_ref[...]) + peb_ref[...]).astype(o_ref.dtype)


def _encoder_stack_kernel(h0_ref, inw_ref, inb_ref, outw_ref, ff1w_ref,
                          ff1b_ref, ff2w_ref, vec_ref, o_ref, h_scr,
                          *, num_heads, eps):
    """One grid step = one post-LN TransformerEncoderLayer for one batch elem.

    grid = (B, L); layer axis is 'arbitrary'; the activation is carried in the
    VMEM scratch `h_scr` across the layer axis and written to HBM only at the
    last layer.
    """
    l = pl.program_id(1)
    n_layers = pl.num_programs(1)

    @pl.when(l == 0)
    def _():
        h_scr[...] = h0_ref[0]

    h = h_scr[...]                                      # (S, D) f32
    S, D = h.shape
    dh = D // num_heads

    # ---- fused QKV projection (softmax scale already baked into Q cols) ----
    qkv = _dot(h, inw_ref[0]) + inb_ref[0]              # (S, 3D) f32

    # ---- multi-head attention; heads concatenated, single out-projection ---
    ctx_parts = []
    for hd in range(num_heads):
        q_h = qkv[:, hd * dh:(hd + 1) * dh]
        k_h = qkv[:, D + hd * dh:D + (hd + 1) * dh]
        v_h = qkv[:, 2 * D + hd * dh:2 * D + (hd + 1) * dh]
        # contract last dims of both operands -> no k.T materialization
        s = lax.dot_general(
            q_h.astype(MXU_DTYPE), k_h.astype(MXU_DTYPE),
            (((1,), (1,)), ((), ())),
            preferred_element_type=jnp.float32)          # (S, S)
        m = jnp.max(s, axis=-1, keepdims=True)
        e = jnp.exp(s - m)
        p = e * pl.reciprocal(jnp.sum(e, axis=-1, keepdims=True), approx=True)
        ctx_parts.append(_dot(p, v_h))                   # (S, dh) f32
    ctx = jnp.concatenate(ctx_parts, axis=-1)            # (S, D)

    vecs = vec_ref[0]                                    # (6, D) f32
    out_b, ff2_b = vecs[0:1], vecs[1:2]
    ln1_g, ln1_b = vecs[2:3], vecs[3:4]
    ln2_g, ln2_b = vecs[4:5], vecs[5:6]

    # single full-depth (S,D)@(D,D) bf16 out-projection
    sa = _dot(ctx, outw_ref[0]) + out_b                  # (S, D)

    # ---- residual + LayerNorm 1 (f32) ----
    x1 = h + sa
    mu1 = jnp.mean(x1, axis=-1, keepdims=True)
    var1 = jnp.mean((x1 - mu1) ** 2, axis=-1, keepdims=True)
    h1 = (x1 - mu1) * lax.rsqrt(var1 + eps) * ln1_g + ln1_b

    # ---- feed-forward with fused ReLU ----
    ff = jnp.maximum(_dot(h1, ff1w_ref[0]) + ff1b_ref[0], 0.0)   # (S, F)
    ff2 = _dot(ff, ff2w_ref[0]) + ff2_b                          # (S, D)

    # ---- residual + LayerNorm 2 (f32) ----
    x2 = h1 + ff2
    mu2 = jnp.mean(x2, axis=-1, keepdims=True)
    var2 = jnp.mean((x2 - mu2) ** 2, axis=-1, keepdims=True)
    y = (x2 - mu2) * lax.rsqrt(var2 + eps) * ln2_g + ln2_b

    h_scr[...] = y

    @pl.when(l == n_layers - 1)
    def _():
        o_ref[0] = y.astype(o_ref.dtype)


def _pool_latent_decode_kernel(enc_ref, latw_ref, latb_ref,
                               decw_ref, decb_ref, lat_ref, out_ref):
    """Fused: mean-pool over sequence + latent linear + decoder linear."""
    pooled = jnp.mean(enc_ref[0], axis=0, keepdims=True)            # (1, D)
    latent = _dot(pooled, latw_ref[...]) + latb_ref[...]            # (1, D)
    lat_ref[0] = latent.astype(lat_ref.dtype)
    out_ref[0] = (_dot(latent, decw_ref[...])
                  + decb_ref[...]).astype(out_ref.dtype)            # (1, S*Din)


# ------------------------------ kernel wrappers -----------------------------

def embed_posenc(x, emb_w, pe_b):
    """x: (B, S, Din) -> (B, S, D) = x @ W_emb + (b_emb + PE)."""
    B, S, Din = x.shape
    D = emb_w.shape[1]
    return pl.pallas_call(
        _embed_pe_kernel,
        out_shape=jax.ShapeDtypeStruct((B, S, D), jnp.float32),
        grid=(B,),
        in_specs=[pl.BlockSpec((1, S, Din), lambda b: (b, 0, 0)),
                  pl.BlockSpec((Din, D), lambda b: (0, 0)),
                  pl.BlockSpec((S, D), lambda b: (0, 0))],
        out_specs=pl.BlockSpec((1, S, D), lambda b: (b, 0, 0)),
        compiler_params=pltpu.CompilerParams(
            dimension_semantics=("parallel",),
            vmem_limit_bytes=VMEM_LIMIT),
    )(x, emb_w, pe_b)


def encoder_stack(h, p, *, num_heads, eps=1e-5):
    """All encoder layers in one pallas_call. h: (B, S, D)."""
    B, S, D = h.shape
    L = p["in_w"].shape[0]
    F = p["ff1_w"].shape[2]
    kern = functools.partial(_encoder_stack_kernel,
                             num_heads=num_heads, eps=eps)
    return pl.pallas_call(
        kern,
        out_shape=jax.ShapeDtypeStruct((B, S, D), jnp.float32),
        grid=(B, L),
        in_specs=[
            pl.BlockSpec((1, S, D), lambda b, l: (b, 0, 0)),      # h0
            pl.BlockSpec((1, D, 3 * D), lambda b, l: (l, 0, 0)),  # in_w
            pl.BlockSpec((1, 1, 3 * D), lambda b, l: (l, 0, 0)),  # in_b
            pl.BlockSpec((1, D, D), lambda b, l: (l, 0, 0)),      # out_w
            pl.BlockSpec((1, D, F), lambda b, l: (l, 0, 0)),      # ff1_w
            pl.BlockSpec((1, 1, F), lambda b, l: (l, 0, 0)),      # ff1_b
            pl.BlockSpec((1, F, D), lambda b, l: (l, 0, 0)),      # ff2_w
            pl.BlockSpec((1, 6, D), lambda b, l: (l, 0, 0)),      # packed vecs
        ],
        out_specs=pl.BlockSpec((1, S, D), lambda b, l: (b, 0, 0)),
        scratch_shapes=[pltpu.VMEM((S, D), jnp.float32)],
        compiler_params=pltpu.CompilerParams(
            dimension_semantics=("parallel", "arbitrary"),
            vmem_limit_bytes=VMEM_LIMIT),
    )(h, p["in_w"], p["in_b"], p["out_w"], p["ff1_w"], p["ff1_b"],
      p["ff2_w"], p["vecs"])


def pool_latent_decode(enc, lat_w, lat_b, dec_w, dec_b):
    """enc: (B, S, D) -> (latent (B, D), out_flat (B, S*Din))."""
    B, S, D = enc.shape
    Nout = dec_w.shape[1]
    lat3, out3 = pl.pallas_call(
        _pool_latent_decode_kernel,
        out_shape=(jax.ShapeDtypeStruct((B, 1, D), jnp.float32),
                   jax.ShapeDtypeStruct((B, 1, Nout), jnp.float32)),
        grid=(B,),
        in_specs=[pl.BlockSpec((1, S, D), lambda b: (b, 0, 0)),
                  pl.BlockSpec((D, D), lambda b: (0, 0)),
                  pl.BlockSpec((1, D), lambda b: (0, 0)),
                  pl.BlockSpec((D, Nout), lambda b: (0, 0)),
                  pl.BlockSpec((1, Nout), lambda b: (0, 0))],
        out_specs=(pl.BlockSpec((1, 1, D), lambda b: (b, 0, 0)),
                   pl.BlockSpec((1, 1, Nout), lambda b: (b, 0, 0))),
        compiler_params=pltpu.CompilerParams(
            dimension_semantics=("parallel",),
            vmem_limit_bytes=VMEM_LIMIT),
    )(enc, lat_w, lat_b, dec_w, dec_b)
    return lat3.reshape(B, D), out3.reshape(B, Nout)


# --------------------------- parameter creation ----------------------------

def _uniform_linear(key, fan_in, fan_out):
    """PyTorch nn.Linear default init; weight returned transposed (in, out)."""
    kw, kb = jax.random.split(key)
    bound = 1.0 / math.sqrt(fan_in)
    w = jax.random.uniform(kw, (fan_in, fan_out), jnp.float32, -bound, bound)
    b = jax.random.uniform(kb, (fan_out,), jnp.float32, -bound, bound)
    return w, b


def make_params(key, seq_len, input_dim, model_dim, num_layers, num_heads,
                ff_dim):
    assert model_dim % 2 == 0, "positional encoding requires even model_dim"
    assert model_dim % num_heads == 0
    dh = model_dim // num_heads
    scale = 1.0 / math.sqrt(dh)
    keys = jax.random.split(key, 3 + num_layers)
    params = {}

    # embedding; its bias is folded into the positional-encoding add below.
    w, b = _uniform_linear(keys[0], input_dim, model_dim)
    params["emb_w"] = w.astype(MXU_DTYPE)

    pos = jnp.arange(seq_len, dtype=jnp.float32)[:, None]
    div = jnp.exp(jnp.arange(0, model_dim, 2, dtype=jnp.float32)
                  * (-math.log(10000.0) / model_dim))
    pe = jnp.zeros((seq_len, model_dim), jnp.float32)
    pe = pe.at[:, 0::2].set(jnp.sin(pos * div))
    pe = pe.at[:, 1::2].set(jnp.cos(pos * div))
    params["pe_b"] = pe + b[None, :]

    w, b = _uniform_linear(keys[1], model_dim, model_dim)
    params["lat_w"], params["lat_b"] = w.astype(MXU_DTYPE), b.reshape(1, -1)
    w, b = _uniform_linear(keys[2], model_dim, seq_len * input_dim)
    params["dec_w"], params["dec_b"] = w.astype(MXU_DTYPE), b.reshape(1, -1)

    in_w, in_b, out_w, ff1_w, ff1_b, ff2_w, vecs = [], [], [], [], [], [], []
    for l in range(num_layers):
        lk = jax.random.split(keys[3 + l], 4)
        # MultiheadAttention in_proj (q|k|v stacked); bake 1/sqrt(dh) into Q.
        w, b = _uniform_linear(lk[0], model_dim, 3 * model_dim)
        w = w.at[:, :model_dim].multiply(scale)
        b = b.at[:model_dim].multiply(scale)
        in_w.append(w.astype(MXU_DTYPE))
        in_b.append(b.reshape(1, 3 * model_dim))
        # out_proj: flat (D, D) bf16 so the kernel does one full-depth matmul.
        w, b = _uniform_linear(lk[1], model_dim, model_dim)
        out_w.append(w.astype(MXU_DTYPE))
        out_bias = b
        # feed-forward
        w, b = _uniform_linear(lk[2], model_dim, ff_dim)
        ff1_w.append(w.astype(MXU_DTYPE))
        ff1_b.append(b.reshape(1, ff_dim))
        w, b = _uniform_linear(lk[3], ff_dim, model_dim)
        ff2_w.append(w.astype(MXU_DTYPE))
        ff2_bias = b
        # pack the six (D,) vectors into one (6, D) slab:
        # [out_b, ff2_b, ln1_g, ln1_b, ln2_g, ln2_b]
        vecs.append(jnp.stack([out_bias, ff2_bias,
                               jnp.ones((model_dim,), jnp.float32),
                               jnp.zeros((model_dim,), jnp.float32),
                               jnp.ones((model_dim,), jnp.float32),
                               jnp.zeros((model_dim,), jnp.float32)]))

    params["in_w"] = jnp.stack(in_w)       # (L, D, 3D)   bf16
    params["in_b"] = jnp.stack(in_b)       # (L, 1, 3D)   f32
    params["out_w"] = jnp.stack(out_w)     # (L, D, D)    bf16
    params["ff1_w"] = jnp.stack(ff1_w)     # (L, D, F)    bf16
    params["ff1_b"] = jnp.stack(ff1_b)     # (L, 1, F)    f32
    params["ff2_w"] = jnp.stack(ff2_w)     # (L, F, D)    bf16
    params["vecs"] = jnp.stack(vecs)       # (L, 6, D)    f32
    return params


# ------------------------------ forward pass -------------------------------

def transformer_autoencoder_forward(params, x, *, seq_len, input_dim,
                                    num_heads):
    B, S, Din = x.shape
    assert S == seq_len and Din == input_dim

    # embedding + positional encoding (dropout = identity in eval mode)
    h = embed_posenc(x, params["emb_w"], params["pe_b"])

    # whole transformer encoder stack in one fused Pallas kernel
    h = encoder_stack(h, params, num_heads=num_heads)

    # fused mean-pool + latent projection + decoder
    latent, out_flat = pool_latent_decode(
        h, params["lat_w"], params["lat_b"], params["dec_w"], params["dec_b"])
    recon = out_flat.reshape(B, seq_len, input_dim)
    return recon, latent


# ---------------------------------- main -----------------------------------

if __name__ == "__main__":
    # Small shapes consistent with the module's forward pass.
    B = 2
    SEQ_LEN = 8
    INPUT_DIM = 4
    MODEL_DIM = 32
    NUM_LAYERS = 2
    NUM_HEADS = 4
    FF_DIM = 64  # scaled-down stand-in for PyTorch's default dim_feedforward=2048

    key = jax.random.PRNGKey(0)
    k_params, k_x = jax.random.split(key)

    params = make_params(k_params, SEQ_LEN, INPUT_DIM, MODEL_DIM,
                         NUM_LAYERS, NUM_HEADS, FF_DIM)
    x = jax.random.normal(k_x, (B, SEQ_LEN, INPUT_DIM), jnp.float32)

    fwd = jax.jit(functools.partial(
        transformer_autoencoder_forward,
        seq_len=SEQ_LEN, input_dim=INPUT_DIM, num_heads=NUM_HEADS))

    recon, latent = fwd(params, x)
    jax.block_until_ready((recon, latent))

    assert recon.shape == (B, SEQ_LEN, INPUT_DIM)
    assert latent.shape == (B, MODEL_DIM)
    print("KERNEL_OK")
</pallas_src>

<mosaic_0001>
module attributes {stable_mosaic.version = 11 : i64} {
  func.func @_pool_latent_decode_kernel(%arg0: i32, %arg1: memref<1x8x32xf32, #tpu.memory_space<vmem>>, %arg2: memref<32x32xbf16, #tpu.memory_space<vmem>>, %arg3: memref<1x32xf32, #tpu.memory_space<vmem>>, %arg4: memref<32x32xbf16, #tpu.memory_space<vmem>>, %arg5: memref<1x32xf32, #tpu.memory_space<vmem>>, %arg6: memref<1x1x32xf32, #tpu.memory_space<vmem>>, %arg7: memref<1x1x32xf32, #tpu.memory_space<vmem>>) attributes {dimension_semantics = [#tpu.dimension_semantics<parallel>], iteration_bounds = array<i64: 2>, scalar_prefetch = 0 : i64, scratch_operands = 0 : i64, tpu.core_type = #tpu.core_type<tc>, window_params = [{transform_indices = @transform_0, window_bounds = array<i64: 1, 8, 32>}, {pipeline_mode = #tpu.pipeline_mode<synchronous>, transform_indices = @transform_1, window_bounds = array<i64: 32, 32>}, {pipeline_mode = #tpu.pipeline_mode<synchronous>, transform_indices = @transform_2, window_bounds = array<i64: 1, 32>}, {pipeline_mode = #tpu.pipeline_mode<synchronous>, transform_indices = @transform_3, window_bounds = array<i64: 32, 32>}, {pipeline_mode = #tpu.pipeline_mode<synchronous>, transform_indices = @transform_4, window_bounds = array<i64: 1, 32>}, {transform_indices = @transform_5, window_bounds = array<i64: 1, 1, 32>}, {transform_indices = @transform_6, window_bounds = array<i64: 1, 1, 32>}]} {
    %c0 = arith.constant 0 : index
    %c0_0 = arith.constant 0 : index
    %c0_1 = arith.constant 0 : index
    %0 = vector.load %arg1[%c0, %c0_0, %c0_1] : memref<1x8x32xf32, #tpu.memory_space<vmem>>, vector<1x8x32xf32>
    %1 = vector.shape_cast %0 : vector<1x8x32xf32> to vector<8x32xf32>
    %cst = arith.constant dense<0.000000e+00> : vector<32xf32>
    %2 = vector.multi_reduction <add>, %1, %cst [0] : vector<8x32xf32> to vector<32xf32>
    %3 = vector.shape_cast %2 : vector<32xf32> to vector<1x32xf32>
    %cst_2 = arith.constant 8.000000e+00 : f32
    %4 = vector.broadcast %cst_2 : f32 to vector<1x32xf32>
    %5 = arith.divf %3, %4 : vector<1x32xf32>
    %c0_3 = arith.constant 0 : index
    %c0_4 = arith.constant 0 : index
    %6 = vector.load %arg2[%c0_3, %c0_4] : memref<32x32xbf16, #tpu.memory_space<vmem>>, vector<32x32xbf16>
    %7 = arith.truncf %5 : vector<1x32xf32> to vector<1x32xbf16>
    %cst_5 = arith.constant dense<0.000000e+00> : vector<1x32xf32>
    %8 = tpu.matmul %7, %6, %cst_5 {dimension_numbers = #tpu.dot_dimension_numbers<[1], [0], [0], [1], [0, 0, 1, 1], [], []>} : vector<1x32xbf16>, vector<32x32xbf16>, vector<1x32xf32> -> vector<1x32xf32>
    %c0_6 = arith.constant 0 : index
    %c0_7 = arith.constant 0 : index
    %9 = vector.load %arg3[%c0_6, %c0_7] : memref<1x32xf32, #tpu.memory_space<vmem>>, vector<1x32xf32>
    %10 = arith.addf %8, %9 : vector<1x32xf32>
    %c0_8 = arith.constant 0 : index
    %c0_9 = arith.constant 0 : index
    %c0_10 = arith.constant 0 : index
    %11 = vector.load %arg6[%c0_8, %c0_9, %c0_10] : memref<1x1x32xf32, #tpu.memory_space<vmem>>, vector<1x1x32xf32>
    %12 = vector.shape_cast %11 : vector<1x1x32xf32> to vector<1x32xf32>
    %13 = vector.shape_cast %10 : vector<1x32xf32> to vector<1x1x32xf32>
    tpu.vector_store %arg6[%c0_8, %c0_9, %c0_10], %13 {strides = array<i32>} : memref<1x1x32xf32, #tpu.memory_space<vmem>>, vector<1x1x32xf32>,
    %c0_11 = arith.constant 0 : index
    %c0_12 = arith.constant 0 : index
    %14 = vector.load %arg4[%c0_11, %c0_12] : memref<32x32xbf16, #tpu.memory_space<vmem>>, vector<32x32xbf16>
    %15 = arith.truncf %10 : vector<1x32xf32> to vector<1x32xbf16>
    %cst_13 = arith.constant dense<0.000000e+00> : vector<1x32xf32>
    %16 = tpu.matmul %15, %14, %cst_13 {dimension_numbers = #tpu.dot_dimension_numbers<[1], [0], [0], [1], [0, 0, 1, 1], [], []>} : vector<1x32xbf16>, vector<32x32xbf16>, vector<1x32xf32> -> vector<1x32xf32>
    %c0_14 = arith.constant 0 : index
    %c0_15 = arith.constant 0 : index
    %17 = vector.load %arg5[%c0_14, %c0_15] : memref<1x32xf32, #tpu.memory_space<vmem>>, vector<1x32xf32>
    %18 = arith.addf %16, %17 : vector<1x32xf32>
    %c0_16 = arith.constant 0 : index
    %c0_17 = arith.constant 0 : index
    %c0_18 = arith.constant 0 : index
    %19 = vector.load %arg7[%c0_16, %c0_17, %c0_18] : memref<1x1x32xf32, #tpu.memory_space<vmem>>, vector<1x1x32xf32>
    %20 = vector.shape_cast %19 : vector<1x1x32xf32> to vector<1x32xf32>
    %21 = vector.shape_cast %18 : vector<1x32xf32> to vector<1x1x32xf32>
    tpu.vector_store %arg7[%c0_16, %c0_17, %c0_18], %21 {strides = array<i32>} : memref<1x1x32xf32, #tpu.memory_space<vmem>>, vector<1x1x32xf32>,
    return
  }
  func.func @transform_0(%arg0: i32) -> (i32, i32, i32) {
    %c0_i32 = arith.constant 0 : i32
    %c0_i32_0 = arith.constant 0 : i32
    %c0_i32_1 = arith.constant 0 : i32
    return %arg0, %c0_i32, %c0_i32_0 : i32, i32, i32
  }
  func.func @transform_1(%arg0: i32) -> (i32, i32) {
    %c0_i32 = arith.constant 0 : i32
    %c0_i32_0 = arith.constant 0 : i32
    %c0_i32_1 = arith.constant 0 : i32
    return %c0_i32, %c0_i32_0 : i32, i32
  }
  func.func @transform_2(%arg0: i32) -> (i32, i32) {
    %c0_i32 = arith.constant 0 : i32
    %c0_i32_0 = arith.constant 0 : i32
    %c0_i32_1 = arith.constant 0 : i32
    return %c0_i32, %c0_i32_0 : i32, i32
  }
  func.func @transform_3(%arg0: i32) -> (i32, i32) {
    %c0_i32 = arith.constant 0 : i32
    %c0_i32_0 = arith.constant 0 : i32
    %c0_i32_1 = arith.constant 0 : i32
    return %c0_i32, %c0_i32_0 : i32, i32
  }
  func.func @transform_4(%arg0: i32) -> (i32, i32) {
    %c0_i32 = arith.constant 0 : i32
    %c0_i32_0 = arith.constant 0 : i32
    %c0_i32_1 = arith.constant 0 : i32
    return %c0_i32, %c0_i32_0 : i32, i32
  }
  func.func @transform_5(%arg0: i32) -> (i32, i32, i32) {
    %c0_i32 = arith.constant 0 : i32
    %c0_i32_0 = arith.constant 0 : i32
    %c0_i32_1 = arith.constant 0 : i32
    return %arg0, %c0_i32, %c0_i32_0 : i32, i32, i32
  }
  func.func @transform_6(%arg0: i32) -> (i32, i32, i32) {
    %c0_i32 = arith.constant 0 : i32
    %c0_i32_0 = arith.constant 0 : i32
    %c0_i32_1 = arith.constant 0 : i32
    return %arg0, %c0_i32, %c0_i32_0 : i32, i32, i32
  }
}

module attributes {stable_mosaic.version = 11 : i64} {
  func.func @_embed_pe_kernel(%arg0: i32, %arg1: memref<1x8x4xf32, #tpu.memory_space<vmem>>, %arg2: memref<4x32xbf16, #tpu.memory_space<vmem>>, %arg3: memref<8x32xf32, #tpu.memory_space<vmem>>, %arg4: memref<1x8x32xf32, #tpu.memory_space<vmem>>) attributes {dimension_semantics = [#tpu.dimension_semantics<parallel>], iteration_bounds = array<i64: 2>, scalar_prefetch = 0 : i64, scratch_operands = 0 : i64, tpu.core_type = #tpu.core_type<tc>, window_params = [{transform_indices = @transform_0, window_bounds = array<i64: 1, 8, 4>}, {pipeline_mode = #tpu.pipeline_mode<synchronous>, transform_indices = @transform_1, window_bounds = array<i64: 4, 32>}, {pipeline_mode = #tpu.pipeline_mode<synchronous>, transform_indices = @transform_2, window_bounds = array<i64: 8, 32>}, {transform_indices = @transform_3, window_bounds = array<i64: 1, 8, 32>}]} {
    %c0 = arith.constant 0 : index
    %c0_0 = arith.constant 0 : index
    %c0_1 = arith.constant 0 : index
    %0 = vector.load %arg1[%c0, %c0_0, %c0_1] : memref<1x8x4xf32, #tpu.memory_space<vmem>>, vector<1x8x4xf32>
    %1 = vector.shape_cast %0 : vector<1x8x4xf32> to vector<8x4xf32>
    %c0_2 = arith.constant 0 : index
    %c0_3 = arith.constant 0 : index
    %2 = vector.load %arg2[%c0_2, %c0_3] : memref<4x32xbf16, #tpu.memory_space<vmem>>, vector<4x32xbf16>
    %3 = arith.truncf %1 : vector<8x4xf32> to vector<8x4xbf16>
    %cst = arith.constant dense<0.000000e+00> : vector<8x32xf32>
    %4 = tpu.matmul %3, %2, %cst {dimension_numbers = #tpu.dot_dimension_numbers<[1], [0], [0], [1], [0, 0, 1, 1], [], []>} : vector<8x4xbf16>, vector<4x32xbf16>, vector<8x32xf32> -> vector<8x32xf32>
    %c0_4 = arith.constant 0 : index
    %c0_5 = arith.constant 0 : index
    %5 = vector.load %arg3[%c0_4, %c0_5] : memref<8x32xf32, #tpu.memory_space<vmem>>, vector<8x32xf32>
    %6 = arith.addf %4, %5 : vector<8x32xf32>
    %c0_6 = arith.constant 0 : index
    %c0_7 = arith.constant 0 : index
    %c0_8 = arith.constant 0 : index
    %7 = vector.load %arg4[%c0_6, %c0_7, %c0_8] : memref<1x8x32xf32, #tpu.memory_space<vmem>>, vector<1x8x32xf32>
    %8 = vector.shape_cast %7 : vector<1x8x32xf32> to vector<8x32xf32>
    %9 = vector.shape_cast %6 : vector<8x32xf32> to vector<1x8x32xf32>
    tpu.vector_store %arg4[%c0_6, %c0_7, %c0_8], %9 {strides = array<i32>} : memref<1x8x32xf32, #tpu.memory_space<vmem>>, vector<1x8x32xf32>,
    return
  }
  func.func @transform_0(%arg0: i32) -> (i32, i32, i32) {
    %c0_i32 = arith.constant 0 : i32
    %c0_i32_0 = arith.constant 0 : i32
    %c0_i32_1 = arith.constant 0 : i32
    return %arg0, %c0_i32, %c0_i32_0 : i32, i32, i32
  }
  func.func @transform_1(%arg0: i32) -> (i32, i32) {
    %c0_i32 = arith.constant 0 : i32
    %c0_i32_0 = arith.constant 0 : i32
    %c0_i32_1 = arith.constant 0 : i32
    return %c0_i32, %c0_i32_0 : i32, i32
  }
  func.func @transform_2(%arg0: i32) -> (i32, i32) {
    %c0_i32 = arith.constant 0 : i32
    %c0_i32_0 = arith.constant 0 : i32
    %c0_i32_1 = arith.constant 0 : i32
    return %c0_i32, %c0_i32_0 : i32, i32
  }
  func.func @transform_3(%arg0: i32) -> (i32, i32, i32) {
    %c0_i32 = arith.constant 0 : i32
    %c0_i32_0 = arith.constant 0 : i32
    %c0_i32_1 = arith.constant 0 : i32
    return %arg0, %c0_i32, %c0_i32_0 : i32, i32, i32
  }
}

module attributes {stable_mosaic.version = 11 : i64} {
  func.func @_encoder_stack_kernel(%arg0: i32, %arg1: i32, %arg2: memref<1x8x32xf32, #tpu.memory_space<vmem>>, %arg3: memref<1x32x96xbf16, #tpu.memory_space<vmem>>, %arg4: memref<1x1x96xf32, #tpu.memory_space<vmem>>, %arg5: memref<1x32x32xbf16, #tpu.memory_space<vmem>>, %arg6: memref<1x32x64xbf16, #tpu.memory_space<vmem>>, %arg7: memref<1x1x64xf32, #tpu.memory_space<vmem>>, %arg8: memref<1x64x32xbf16, #tpu.memory_space<vmem>>, %arg9: memref<1x6x32xf32, #tpu.memory_space<vmem>>, %arg10: memref<1x8x32xf32, #tpu.memory_space<vmem>>, %arg11: memref<8x32xf32, #tpu.memory_space<vmem>>) attributes {dimension_semantics = [#tpu.dimension_semantics<parallel>, #tpu.dimension_semantics<arbitrary>], iteration_bounds = array<i64: 2, 2>, scalar_prefetch = 0 : i64, scratch_operands = 1 : i64, tpu.core_type = #tpu.core_type<tc>, window_params = [{transform_indices = @transform_0, window_bounds = array<i64: 1, 8, 32>}, {transform_indices = @transform_1, window_bounds = array<i64: 1, 32, 96>}, {transform_indices = @transform_2, window_bounds = array<i64: 1, 1, 96>}, {transform_indices = @transform_3, window_bounds = array<i64: 1, 32, 32>}, {transform_indices = @transform_4, window_bounds = array<i64: 1, 32, 64>}, {transform_indices = @transform_5, window_bounds = array<i64: 1, 1, 64>}, {transform_indices = @transform_6, window_bounds = array<i64: 1, 64, 32>}, {transform_indices = @transform_7, window_bounds = array<i64: 1, 6, 32>}, {transform_indices = @transform_8, window_bounds = array<i64: 1, 8, 32>}]} {
    %c0_i32 = arith.constant 0 : i32
    %0 = arith.cmpi eq, %arg1, %c0_i32 : i32
    %1 = arith.extui %0 : i1 to i32
    %c0_i32_0 = arith.constant 0 : i32
    %2 = arith.cmpi ne, %1, %c0_i32_0 : i32
    scf.if %2 {
      %c0_56 = arith.constant 0 : index
      %c0_57 = arith.constant 0 : index
      %c0_58 = arith.constant 0 : index
      %169 = vector.load %arg2[%c0_56, %c0_57, %c0_58] : memref<1x8x32xf32, #tpu.memory_space<vmem>>, vector<1x8x32xf32>
      %170 = vector.shape_cast %169 : vector<1x8x32xf32> to vector<8x32xf32>
      %c0_59 = arith.constant 0 : index
      %c0_60 = arith.constant 0 : index
      %171 = vector.load %arg11[%c0_59, %c0_60] : memref<8x32xf32, #tpu.memory_space<vmem>>, vector<8x32xf32>
      tpu.vector_store %arg11[%c0_59, %c0_60], %170 {strides = array<i32>} : memref<8x32xf32, #tpu.memory_space<vmem>>, vector<8x32xf32>,
    } else {
    }
    %c0 = arith.constant 0 : index
    %c0_1 = arith.constant 0 : index
    %3 = vector.load %arg11[%c0, %c0_1] : memref<8x32xf32, #tpu.memory_space<vmem>>, vector<8x32xf32>
    %c0_2 = arith.constant 0 : index
    %c0_3 = arith.constant 0 : index
    %c0_4 = arith.constant 0 : index
    %4 = vector.load %arg3[%c0_2, %c0_3, %c0_4] : memref<1x32x96xbf16, #tpu.memory_space<vmem>>, vector<1x32x96xbf16>
    %5 = vector.shape_cast %4 : vector<1x32x96xbf16> to vector<32x96xbf16>
    %6 = arith.truncf %3 : vector<8x32xf32> to vector<8x32xbf16>
    %cst = arith.constant dense<0.000000e+00> : vector<8x96xf32>
    %7 = tpu.matmul %6, %5, %cst {dimension_numbers = #tpu.dot_dimension_numbers<[1], [0], [0], [1], [0, 0, 1, 1], [], []>} : vector<8x32xbf16>, vector<32x96xbf16>, vector<8x96xf32> -> vector<8x96xf32>
    %c0_5 = arith.constant 0 : index
    %c0_6 = arith.constant 0 : index
    %c0_7 = arith.constant 0 : index
    %8 = vector.load %arg4[%c0_5, %c0_6, %c0_7] : memref<1x1x96xf32, #tpu.memory_space<vmem>>, vector<1x1x96xf32>
    %9 = vector.shape_cast %8 : vector<1x1x96xf32> to vector<1x96xf32>
    %10 = vector.broadcast %9 : vector<1x96xf32> to vector<8x96xf32>
    %11 = arith.addf %7, %10 : vector<8x96xf32>
    %12 = vector.extract_strided_slice %11 {offsets = [0, 0], sizes = [8, 8], strides = [1, 1]} : vector<8x96xf32> to vector<8x8xf32>
    %13 = vector.extract_strided_slice %11 {offsets = [0, 32], sizes = [8, 8], strides = [1, 1]} : vector<8x96xf32> to vector<8x8xf32>
    %14 = vector.extract_strided_slice %11 {offsets = [0, 64], sizes = [8, 8], strides = [1, 1]} : vector<8x96xf32> to vector<8x8xf32>
    %15 = arith.truncf %12 : vector<8x8xf32> to vector<8x8xbf16>
    %16 = arith.truncf %13 : vector<8x8xf32> to vector<8x8xbf16>
    %cst_8 = arith.constant dense<0.000000e+00> : vector<8x8xf32>
    %17 = tpu.matmul %15, %16, %cst_8 {dimension_numbers = #tpu.dot_dimension_numbers<[1], [1], [0], [0], [0, 0, 1, 0], [], []>} : vector<8x8xbf16>, vector<8x8xbf16>, vector<8x8xf32> -> vector<8x8xf32>
    %cst_9 = arith.constant dense<0xFF800000> : vector<8xf32>
    %18 = vector.multi_reduction <maximumf>, %17, %cst_9 [1] : vector<8x8xf32> to vector<8xf32>
    %19 = vector.shape_cast %18 : vector<8xf32> to vector<8x1xf32>
    %20 = vector.broadcast %19 : vector<8x1xf32> to vector<8x8xf32>
    %21 = arith.subf %17, %20 : vector<8x8xf32>
    %22 = math.exp %21 : vector<8x8xf32>
    %cst_10 = arith.constant dense<0.000000e+00> : vector<8xf32>
    %23 = vector.multi_reduction <add>, %22, %cst_10 [1] : vector<8x8xf32> to vector<8xf32>
    %24 = vector.shape_cast %23 : vector<8xf32> to vector<8x1xf32>
    %25 = tpu.reciprocal %24 {approx = true} : vector<8x1xf32> -> vector<8x1xf32>
    %26 = vector.broadcast %25 : vector<8x1xf32> to vector<8x8xf32>
    %27 = arith.mulf %22, %26 : vector<8x8xf32>
    %28 = arith.truncf %27 : vector<8x8xf32> to vector<8x8xbf16>
    %29 = arith.truncf %14 : vector<8x8xf32> to vector<8x8xbf16>
    %cst_11 = arith.constant dense<0.000000e+00> : vector<8x8xf32>
    %30 = tpu.matmul %28, %29, %cst_11 {dimension_numbers = #tpu.dot_dimension_numbers<[1], [0], [0], [1], [0, 0, 1, 1], [], []>} : vector<8x8xbf16>, vector<8x8xbf16>, vector<8x8xf32> -> vector<8x8xf32>
    %31 = vector.extract_strided_slice %11 {offsets = [0, 8], sizes = [8, 8], strides = [1, 1]} : vector<8x96xf32> to vector<8x8xf32>
    %32 = vector.extract_strided_slice %11 {offsets = [0, 40], sizes = [8, 8], strides = [1, 1]} : vector<8x96xf32> to vector<8x8xf32>
    %33 = vector.extract_strided_slice %11 {offsets = [0, 72], sizes = [8, 8], strides = [1, 1]} : vector<8x96xf32> to vector<8x8xf32>
    %34 = arith.truncf %31 : vector<8x8xf32> to vector<8x8xbf16>
    %35 = arith.truncf %32 : vector<8x8xf32> to vector<8x8xbf16>
    %cst_12 = arith.constant dense<0.000000e+00> : vector<8x8xf32>
    %36 = tpu.matmul %34, %35, %cst_12 {dimension_numbers = #tpu.dot_dimension_numbers<[1], [1], [0], [0], [0, 0, 1, 0], [], []>} : vector<8x8xbf16>, vector<8x8xbf16>, vector<8x8xf32> -> vector<8x8xf32>
    %cst_13 = arith.constant dense<0xFF800000> : vector<8xf32>
    %37 = vector.multi_reduction <maximumf>, %36, %cst_13 [1] : vector<8x8xf32> to vector<8xf32>
    %38 = vector.shape_cast %37 : vector<8xf32> to vector<8x1xf32>
    %39 = vector.broadcast %38 : vector<8x1xf32> to vector<8x8xf32>
    %40 = arith.subf %36, %39 : vector<8x8xf32>
    %41 = math.exp %40 : vector<8x8xf32>
    %cst_14 = arith.constant dense<0.000000e+00> : vector<8xf32>
    %42 = vector.multi_reduction <add>, %41, %cst_14 [1] : vector<8x8xf32> to vector<8xf32>
    %43 = vector.shape_cast %42 : vector<8xf32> to vector<8x1xf32>
    %44 = tpu.reciprocal %43 {approx = true} : vector<8x1xf32> -> vector<8x1xf32>
    %45 = vector.broadcast %44 : vector<8x1xf32> to vector<8x8xf32>
    %46 = arith.mulf %41, %45 : vector<8x8xf32>
    %47 = arith.truncf %46 : vector<8x8xf32> to vector<8x8xbf16>
    %48 = arith.truncf %33 : vector<8x8xf32> to vector<8x8xbf16>
    %cst_15 = arith.constant dense<0.000000e+00> : vector<8x8xf32>
    %49 = tpu.matmul %47, %48, %cst_15 {dimension_numbers = #tpu.dot_dimension_numbers<[1], [0], [0], [1], [0, 0, 1, 1], [], []>} : vector<8x8xbf16>, vector<8x8xbf16>, vector<8x8xf32> -> vector<8x8xf32>
    %50 = vector.extract_strided_slice %11 {offsets = [0, 16], sizes = [8, 8], strides = [1, 1]} : vector<8x96xf32> to vector<8x8xf32>
    %51 = vector.extract_strided_slice %11 {offsets = [0, 48], sizes = [8, 8], strides = [1, 1]} : vector<8x96xf32> to vector<8x8xf32>
    %52 = vector.extract_strided_slice %11 {offsets = [0, 80], sizes = [8, 8], strides = [1, 1]} : vector<8x96xf32> to vector<8x8xf32>
    %53 = arith.truncf %50 : vector<8x8xf32> to vector<8x8xbf16>
    %54 = arith.truncf %51 : vector<8x8xf32> to vector<8x8xbf16>
    %cst_16 = arith.constant dense<0.000000e+00> : vector<8x8xf32>
    %55 = tpu.matmul %53, %54, %cst_16 {dimension_numbers = #tpu.dot_dimension_numbers<[1], [1], [0], [0], [0, 0, 1, 0], [], []>} : vector<8x8xbf16>, vector<8x8xbf16>, vector<8x8xf32> -> vector<8x8xf32>
    %cst_17 = arith.constant dense<0xFF800000> : vector<8xf32>
    %56 = vector.multi_reduction <maximumf>, %55, %cst_17 [1] : vector<8x8xf32> to vector<8xf32>
    %57 = vector.shape_cast %56 : vector<8xf32> to vector<8x1xf32>
    %58 = vector.broadcast %57 : vector<8x1xf32> to vector<8x8xf32>
    %59 = arith.subf %55, %58 : vector<8x8xf32>
    %60 = math.exp %59 : vector<8x8xf32>
    %cst_18 = arith.constant dense<0.000000e+00> : vector<8xf32>
    %61 = vector.multi_reduction <add>, %60, %cst_18 [1] : vector<8x8xf32> to vector<8xf32>
    %62 = vector.shape_cast %61 : vector<8xf32> to vector<8x1xf32>
    %63 = tpu.reciprocal %62 {approx = true} : vector<8x1xf32> -> vector<8x1xf32>
    %64 = vector.broadcast %63 : vector<8x1xf32> to vector<8x8xf32>
    %65 = arith.mulf %60, %64 : vector<8x8xf32>
    %66 = arith.truncf %65 : vector<8x8xf32> to vector<8x8xbf16>
    %67 = arith.truncf %52 : vector<8x8xf32> to vector<8x8xbf16>
    %cst_19 = arith.constant dense<0.000000e+00> : vector<8x8xf32>
    %68 = tpu.matmul %66, %67, %cst_19 {dimension_numbers = #tpu.dot_dimension_numbers<[1], [0], [0], [1], [0, 0, 1, 1], [], []>} : vector<8x8xbf16>, vector<8x8xbf16>, vector<8x8xf32> -> vector<8x8xf32>
    %69 = vector.extract_strided_slice %11 {offsets = [0, 24], sizes = [8, 8], strides = [1, 1]} : vector<8x96xf32> to vector<8x8xf32>
    %70 = vector.extract_strided_slice %11 {offsets = [0, 56], sizes = [8, 8], strides = [1, 1]} : vector<8x96xf32> to vector<8x8xf32>
    %71 = vector.extract_strided_slice %11 {offsets = [0, 88], sizes = [8, 8], strides = [1, 1]} : vector<8x96xf32> to vector<8x8xf32>
    %72 = arith.truncf %69 : vector<8x8xf32> to vector<8x8xbf16>
    %73 = arith.truncf %70 : vector<8x8xf32> to vector<8x8xbf16>
    %cst_20 = arith.constant dense<0.000000e+00> : vector<8x8xf32>
    %74 = tpu.matmul %72, %73, %cst_20 {dimension_numbers = #tpu.dot_dimension_numbers<[1], [1], [0], [0], [0, 0, 1, 0], [], []>} : vector<8x8xbf16>, vector<8x8xbf16>, vector<8x8xf32> -> vector<8x8xf32>
    %cst_21 = arith.constant dense<0xFF800000> : vector<8xf32>
    %75 = vector.multi_reduction <maximumf>, %74, %cst_21 [1] : vector<8x8xf32> to vector<8xf32>
    %76 = vector.shape_cast %75 : vector<8xf32> to vector<8x1xf32>
    %77 = vector.broadcast %76 : vector<8x1xf32> to vector<8x8xf32>
    %78 = arith.subf %74, %77 : vector<8x8xf32>
    %79 = math.exp %78 : vector<8x8xf32>
    %cst_22 = arith.constant dense<0.000000e+00> : vector<8xf32>
    %80 = vector.multi_reduction <add>, %79, %cst_22 [1] : vector<8x8xf32> to vector<8xf32>
    %81 = vector.shape_cast %80 : vector<8xf32> to vector<8x1xf32>
    %82 = tpu.reciprocal %81 {approx = true} : vector<8x1xf32> -> vector<8x1xf32>
    %83 = vector.broadcast %82 : vector<8x1xf32> to vector<8x8xf32>
    %84 = arith.mulf %79, %83 : vector<8x8xf32>
    %85 = arith.truncf %84 : vector<8x8xf32> to vector<8x8xbf16>
    %86 = arith.truncf %71 : vector<8x8xf32> to vector<8x8xbf16>
    %cst_23 = arith.constant dense<0.000000e+00> : vector<8x8xf32>
    %87 = tpu.matmul %85, %86, %cst_23 {dimension_numbers = #tpu.dot_dimension_numbers<[1], [0], [0], [1], [0, 0, 1, 1], [], []>} : vector<8x8xbf16>, vector<8x8xbf16>, vector<8x8xf32> -> vector<8x8xf32>
    %88 = tpu.concatenate %30, %49, %68, %87 in 1 : vector<8x8xf32>, vector<8x8xf32>, vector<8x8xf32>, vector<8x8xf32> -> vector<8x32xf32>
    %c0_24 = arith.constant 0 : index
    %c0_25 = arith.constant 0 : index
    %c0_26 = arith.constant 0 : index
    %89 = vector.load %arg9[%c0_24, %c0_25, %c0_26] : memref<1x6x32xf32, #tpu.memory_space<vmem>>, vector<1x6x32xf32>
    %90 = vector.shape_cast %89 : vector<1x6x32xf32> to vector<6x32xf32>
    %91 = vector.extract_strided_slice %90 {offsets = [0, 0], sizes = [1, 32], strides = [1, 1]} : vector<6x32xf32> to vector<1x32xf32>
    %92 = vector.extract_strided_slice %90 {offsets = [1, 0], sizes = [1, 32], strides = [1, 1]} : vector<6x32xf32> to vector<1x32xf32>
    %93 = vector.extract_strided_slice %90 {offsets = [2, 0], sizes = [1, 32], strides = [1, 1]} : vector<6x32xf32> to vector<1x32xf32>
    %94 = vector.extract_strided_slice %90 {offsets = [3, 0], sizes = [1, 32], strides = [1, 1]} : vector<6x32xf32> to vector<1x32xf32>
    %95 = vector.extract_strided_slice %90 {offsets = [4, 0], sizes = [1, 32], strides = [1, 1]} : vector<6x32xf32> to vector<1x32xf32>
    %96 = vector.extract_strided_slice %90 {offsets = [5, 0], sizes = [1, 32], strides = [1, 1]} : vector<6x32xf32> to vector<1x32xf32>
    %c0_27 = arith.constant 0 : index
    %c0_28 = arith.constant 0 : index
    %c0_29 = arith.constant 0 : index
    %97 = vector.load %arg5[%c0_27, %c0_28, %c0_29] : memref<1x32x32xbf16, #tpu.memory_space<vmem>>, vector<1x32x32xbf16>
    %98 = vector.shape_cast %97 : vector<1x32x32xbf16> to vector<32x32xbf16>
    %99 = arith.truncf %88 : vector<8x32xf32> to vector<8x32xbf16>
    %cst_30 = arith.constant dense<0.000000e+00> : vector<8x32xf32>
    %100 = tpu.matmul %99, %98, %cst_30 {dimension_numbers = #tpu.dot_dimension_numbers<[1], [0], [0], [1], [0, 0, 1, 1], [], []>} : vector<8x32xbf16>, vector<32x32xbf16>, vector<8x32xf32> -> vector<8x32xf32>
    %101 = vector.broadcast %91 : vector<1x32xf32> to vector<8x32xf32>
    %102 = arith.addf %100, %101 : vector<8x32xf32>
    %103 = arith.addf %3, %102 : vector<8x32xf32>
    %cst_31 = arith.constant dense<0.000000e+00> : vector<8xf32>
    %104 = vector.multi_reduction <add>, %103, %cst_31 [1] : vector<8x32xf32> to vector<8xf32>
    %105 = vector.shape_cast %104 : vector<8xf32> to vector<8x1xf32>
    %cst_32 = arith.constant 3.200000e+01 : f32
    %106 = vector.broadcast %cst_32 : f32 to vector<8x1xf32>
    %107 = arith.divf %105, %106 : vector<8x1xf32>
    %108 = vector.broadcast %107 : vector<8x1xf32> to vector<8x32xf32>
    %109 = arith.subf %103, %108 : vector<8x32xf32>
    %110 = arith.mulf %109, %109 : vector<8x32xf32>
    %cst_33 = arith.constant dense<0.000000e+00> : vector<8xf32>
    %111 = vector.multi_reduction <add>, %110, %cst_33 [1] : vector<8x32xf32> to vector<8xf32>
    %112 = vector.shape_cast %111 : vector<8xf32> to vector<8x1xf32>
    %cst_34 = arith.constant 3.200000e+01 : f32
    %113 = vector.broadcast %cst_34 : f32 to vector<8x1xf32>
    %114 = arith.divf %112, %113 : vector<8x1xf32>
    %115 = vector.broadcast %107 : vector<8x1xf32> to vector<8x32xf32>
    %116 = arith.subf %103, %115 : vector<8x32xf32>
    %cst_35 = arith.constant 9.99999974E-6 : f32
    %117 = vector.broadcast %cst_35 : f32 to vector<8x1xf32>
    %118 = arith.addf %114, %117 : vector<8x1xf32>
    %119 = math.rsqrt %118 : vector<8x1xf32>
    %120 = vector.broadcast %119 : vector<8x1xf32> to vector<8x32xf32>
    %121 = arith.mulf %116, %120 : vector<8x32xf32>
    %122 = vector.broadcast %93 : vector<1x32xf32> to vector<8x32xf32>
    %123 = arith.mulf %121, %122 : vector<8x32xf32>
    %124 = vector.broadcast %94 : vector<1x32xf32> to vector<8x32xf32>
    %125 = arith.addf %123, %124 : vector<8x32xf32>
    %c0_36 = arith.constant 0 : index
    %c0_37 = arith.constant 0 : index
    %c0_38 = arith.constant 0 : index
    %126 = vector.load %arg6[%c0_36, %c0_37, %c0_38] : memref<1x32x64xbf16, #tpu.memory_space<vmem>>, vector<1x32x64xbf16>
    %127 = vector.shape_cast %126 : vector<1x32x64xbf16> to vector<32x64xbf16>
    %128 = arith.truncf %125 : vector<8x32xf32> to vector<8x32xbf16>
    %cst_39 = arith.constant dense<0.000000e+00> : vector<8x64xf32>
    %129 = tpu.matmul %128, %127, %cst_39 {dimension_numbers = #tpu.dot_dimension_numbers<[1], [0], [0], [1], [0, 0, 1, 1], [], []>} : vector<8x32xbf16>, vector<32x64xbf16>, vector<8x64xf32> -> vector<8x64xf32>
    %c0_40 = arith.constant 0 : index
    %c0_41 = arith.constant 0 : index
    %c0_42 = arith.constant 0 : index
    %130 = vector.load %arg7[%c0_40, %c0_41, %c0_42] : memref<1x1x64xf32, #tpu.memory_space<vmem>>, vector<1x1x64xf32>
    %131 = vector.shape_cast %130 : vector<1x1x64xf32> to vector<1x64xf32>
    %132 = vector.broadcast %131 : vector<1x64xf32> to vector<8x64xf32>
    %133 = arith.addf %129, %132 : vector<8x64xf32>
    %cst_43 = arith.constant 0.000000e+00 : f32
    %134 = vector.broadcast %cst_43 : f32 to vector<8x64xf32>
    %135 = arith.maximumf %133, %134 : vector<8x64xf32>
    %c0_44 = arith.constant 0 : index
    %c0_45 = arith.constant 0 : index
    %c0_46 = arith.constant 0 : index
    %136 = vector.load %arg8[%c0_44, %c0_45, %c0_46] : memref<1x64x32xbf16, #tpu.memory_space<vmem>>, vector<1x64x32xbf16>
    %137 = vector.shape_cast %136 : vector<1x64x32xbf16> to vector<64x32xbf16>
    %138 = arith.truncf %135 : vector<8x64xf32> to vector<8x64xbf16>
    %cst_47 = arith.constant dense<0.000000e+00> : vector<8x32xf32>
    %139 = tpu.matmul %138, %137, %cst_47 {dimension_numbers = #tpu.dot_dimension_numbers<[1], [0], [0], [1], [0, 0, 1, 1], [], []>} : vector<8x64xbf16>, vector<64x32xbf16>, vector<8x32xf32> -> vector<8x32xf32>
    %140 = vector.broadcast %92 : vector<1x32xf32> to vector<8x32xf32>
    %141 = arith.addf %139, %140 : vector<8x32xf32>
    %142 = arith.addf %125, %141 : vector<8x32xf32>
    %cst_48 = arith.constant dense<0.000000e+00> : vector<8xf32>
    %143 = vector.multi_reduction <add>, %142, %cst_48 [1] : vector<8x32xf32> to vector<8xf32>
    %144 = vector.shape_cast %143 : vector<8xf32> to vector<8x1xf32>
    %cst_49 = arith.constant 3.200000e+01 : f32
    %145 = vector.broadcast %cst_49 : f32 to vector<8x1xf32>
    %146 = arith.divf %144, %145 : vector<8x1xf32>
    %147 = vector.broadcast %146 : vector<8x1xf32> to vector<8x32xf32>
    %148 = arith.subf %142, %147 : vector<8x32xf32>
    %149 = arith.mulf %148, %148 : vector<8x32xf32>
    %cst_50 = arith.constant dense<0.000000e+00> : vector<8xf32>
    %150 = vector.multi_reduction <add>, %149, %cst_50 [1] : vector<8x32xf32> to vector<8xf32>
    %151 = vector.shape_cast %150 : vector<8xf32> to vector<8x1xf32>
    %cst_51 = arith.constant 3.200000e+01 : f32
    %152 = vector.broadcast %cst_51 : f32 to vector<8x1xf32>
    %153 = arith.divf %151, %152 : vector<8x1xf32>
    %154 = vector.broadcast %146 : vector<8x1xf32> to vector<8x32xf32>
    %155 = arith.subf %142, %154 : vector<8x32xf32>
    %cst_52 = arith.constant 9.99999974E-6 : f32
    %156 = vector.broadcast %cst_52 : f32 to vector<8x1xf32>
    %157 = arith.addf %153, %156 : vector<8x1xf32>
    %158 = math.rsqrt %157 : vector<8x1xf32>
    %159 = vector.broadcast %158 : vector<8x1xf32> to vector<8x32xf32>
    %160 = arith.mulf %155, %159 : vector<8x32xf32>
    %161 = vector.broadcast %95 : vector<1x32xf32> to vector<8x32xf32>
    %162 = arith.mulf %160, %161 : vector<8x32xf32>
    %163 = vector.broadcast %96 : vector<1x32xf32> to vector<8x32xf32>
    %164 = arith.addf %162, %163 : vector<8x32xf32>
    %c0_53 = arith.constant 0 : index
    %c0_54 = arith.constant 0 : index
    %165 = vector.load %arg11[%c0_53, %c0_54] : memref<8x32xf32, #tpu.memory_space<vmem>>, vector<8x32xf32>
    tpu.vector_store %arg11[%c0_53, %c0_54], %164 {strides = array<i32>} : memref<8x32xf32, #tpu.memory_space<vmem>>, vector<8x32xf32>,
    %c1_i32 = arith.constant 1 : i32
    %166 = arith.cmpi eq, %arg1, %c1_i32 : i32
    %167 = arith.extui %166 : i1 to i32
    %c0_i32_55 = arith.constant 0 : i32
    %168 = arith.cmpi ne, %167, %c0_i32_55 : i32
    scf.if %168 {
      %c0_56 = arith.constant 0 : index
      %c0_57 = arith.constant 0 : index
      %c0_58 = arith.constant 0 : index
      %169 = vector.load %arg10[%c0_56, %c0_57, %c0_58] : memref<1x8x32xf32, #tpu.memory_space<vmem>>, vector<1x8x32xf32>
      %170 = vector.shape_cast %169 : vector<1x8x32xf32> to vector<8x32xf32>
      %171 = vector.shape_cast %164 : vector<8x32xf32> to vector<1x8x32xf32>
      tpu.vector_store %arg10[%c0_56, %c0_57, %c0_58], %171 {strides = array<i32>} : memref<1x8x32xf32, #tpu.memory_space<vmem>>, vector<1x8x32xf32>,
    } else {
    }
    return
  }
  func.func @transform_0(%arg0: i32, %arg1: i32) -> (i32, i32, i32) {
    %c0_i32 = arith.constant 0 : i32
    %c0_i32_0 = arith.constant 0 : i32
    %c0_i32_1 = arith.constant 0 : i32
    return %arg0, %c0_i32, %c0_i32_0 : i32, i32, i32
  }
  func.func @transform_1(%arg0: i32, %arg1: i32) -> (i32, i32, i32) {
    %c0_i32 = arith.constant 0 : i32
    %c0_i32_0 = arith.constant 0 : i32
    %c0_i32_1 = arith.constant 0 : i32
    return %arg1, %c0_i32, %c0_i32_0 : i32, i32, i32
  }
  func.func @transform_2(%arg0: i32, %arg1: i32) -> (i32, i32, i32) {
    %c0_i32 = arith.constant 0 : i32
    %c0_i32_0 = arith.constant 0 : i32
    %c0_i32_1 = arith.constant 0 : i32
    return %arg1, %c0_i32, %c0_i32_0 : i32, i32, i32
  }
  func.func @transform_3(%arg0: i32, %arg1: i32) -> (i32, i32, i32) {
    %c0_i32 = arith.constant 0 : i32
    %c0_i32_0 = arith.constant 0 : i32
    %c0_i32_1 = arith.constant 0 : i32
    return %arg1, %c0_i32, %c0_i32_0 : i32, i32, i32
  }
  func.func @transform_4(%arg0: i32, %arg1: i32) -> (i32, i32, i32) {
    %c0_i32 = arith.constant 0 : i32
    %c0_i32_0 = arith.constant 0 : i32
    %c0_i32_1 = arith.constant 0 : i32
    return %arg1, %c0_i32, %c0_i32_0 : i32, i32, i32
  }
  func.func @transform_5(%arg0: i32, %arg1: i32) -> (i32, i32, i32) {
    %c0_i32 = arith.constant 0 : i32
    %c0_i32_0 = arith.constant 0 : i32
    %c0_i32_1 = arith.constant 0 : i32
    return %arg1, %c0_i32, %c0_i32_0 : i32, i32, i32
  }
  func.func @transform_6(%arg0: i32, %arg1: i32) -> (i32, i32, i32) {
    %c0_i32 = arith.constant 0 : i32
    %c0_i32_0 = arith.constant 0 : i32
    %c0_i32_1 = arith.constant 0 : i32
    return %arg1, %c0_i32, %c0_i32_0 : i32, i32, i32
  }
  func.func @transform_7(%arg0: i32, %arg1: i32) -> (i32, i32, i32) {
    %c0_i32 = arith.constant 0 : i32
    %c0_i32_0 = arith.constant 0 : i32
    %c0_i32_1 = arith.constant 0 : i32
    return %arg1, %c0_i32, %c0_i32_0 : i32, i32, i32
  }
  func.func @transform_8(%arg0: i32, %arg1: i32) -> (i32, i32, i32) {
    %c0_i32 = arith.constant 0 : i32
    %c0_i32_0 = arith.constant 0 : i32
    %c0_i32_1 = arith.constant 0 : i32
    return %arg0, %c0_i32, %c0_i32_0 : i32, i32, i32
  }
}

</mosaic_0001>

<llo_original>
// kernel: transformer_autoencoder_forward.5
$region0: #{transformer_autoencoder_forward.5}
  #allocation0 [shape = 'u32[]', space=smem, size = 0x4, offset = 0x4, fixed_abs, tag = 'smem constant byte address 0x4 - core index']
  #allocation1 [shape = 'u32[144,128]{1,0:T(1,128)}', space=vmem, size = 0x12000, scoped, tag = 'internal scratch']
  %s0 = inlined_call_operand.vmem [shape: f32[2,8,32], index: 0, kind: input, shape index: {}]
  %s1 = inlined_call_operand.vmem [shape: bf16[32,32], index: 1, kind: input, shape index: {}]
  %s2 = inlined_call_operand.vmem [shape: f32[1,32], index: 2, kind: input, shape index: {}]
  %s3 = inlined_call_operand.vmem [shape: bf16[32,32], index: 3, kind: input, shape index: {}]
  %s4 = inlined_call_operand.vmem [shape: f32[1,32], index: 4, kind: input, shape index: {}]
  %s5 = inlined_call_operand.hbm [shape: f32[2,1,32], index: 5, kind: output, shape index: {0}]
  %s6 = inlined_call_operand.vmem [shape: f32[2,1,32], index: 6, kind: output, shape index: {1}]
  %7 = xla_tuple %s5, %s6
  %s8 = sld [smem:[#allocation0]]
  $region61: #{transformer_autoencoder_forward.5} parent=0
    _
  %s10 = ssub.s32 1, %s8
  %s11 = scalar_select 0, %s10, %s8
  $region1: #{transformer_autoencoder_forward.5} parent=0
    #allocation2 [shape = 'u8[1024]{0}', space=vmem, size = 0x400, scoped, tag = 'output window, operand 0']
    #allocation3 [shape = 's32[2]{0}', space=sflag, size = 0x8, scoped, tag = 'scoped memory for transformer_autoencoder_forward.5']
    %12 = vsyncpa [#allocation3], 0
    %s13 = scalar_lea.sflag [#allocation3], 1
    %14 = vsyncpa %s13, 0
    loop: start=0, step=1, limit=4
    $region2: #{transformer_autoencoder_forward.5} parent=1 // loop_pre_header
      _
    $region3: #{transformer_autoencoder_forward.5} parent=1 // loop_header
      %s16 = sphi 0, %s20
      %p17 = scmp.ge.s32.totalorder %s16, 4
      %s26 = sphi 0, %s28
      %s29 = sphi 0, %s26
      %s30 = sphi 0, %s29
      %s46 = sphi 0, %s30
      %s50 = sphi 0, %s50
      %s52 = sphi 0, %s50
      %s53 = sphi 0, %s52
      %s67 = sphi 0, %s53
      %s71 = sphi 0, %s71
      %s73 = sphi 0, %s71
      %s74 = sphi 0, %s73
      %s88 = sphi 0, %s74
      %s92 = sphi 0, %s92
      %s94 = sphi 0, %s92
      %s95 = sphi 0, %s94
      %s109 = sphi 0, %s95
      %s113 = sphi 0, %s113
      %s115 = sphi 0, %s113
      %s116 = sphi 0, %s115
      %s130 = sphi 0, %s116
      %s136 = sphi 0, %s138
      %s139 = sphi 0, %s136
      %s140 = sphi 0, %s139
      %s156 = sphi 0, %s140
      %s162 = sphi 0, %s164
      %s165 = sphi 0, %s162
      %s166 = sphi 0, %s165
      %s182 = sphi 0, %s166
    $region4: #{transformer_autoencoder_forward.5} parent=1 // loop_header_branch
      %19 = sbr.rel (%p17) target = $region8
    $region5: #{transformer_autoencoder_forward.5} parent=1 // loop_body
      %s21 = ssub.s32 %s16, 1
      %s22 = ssub.s32 %s16, 2
      %s23 = sadd.s32 %s16, 1
      %s24 = ssub.s32 %s16, %s23
      %p25 = scmp.eq.s32.totalorder %s24, 0
      %s27 = sadd.s32 %s26, 1
      %s28 = scalar_select %p25, %s26, %s27
      %p31 = pneg %p25
      %p32 = scmp.eq.s32.totalorder %s16, 1
      %p33 = por %p31, %p32
      %p34 = scmp.ne.s32.totalorder %s26, %s29
      %p35 = scmp.eq.s32.totalorder %s16, 0
      %p36 = por %p34, %p35
      %p37 = scmp.ne.s32.totalorder %s26, %s29
      %p38 = scmp.eq.s32.totalorder %s21, 1
      %p39 = por %p37, %p38
      %p40 = scmp.ne.s32.totalorder %s29, %s30
      %p41 = scmp.eq.s32.totalorder %s21, 0
      %p42 = por %p40, %p41
      %p43 = scmp.ne.s32.totalorder %s29, %s30
      %p44 = scmp.eq.s32.totalorder %s22, 1
      %p45 = por %p43, %p44
      %p47 = scmp.ne.s32.totalorder %s30, %s46
      %p48 = scmp.eq.s32.totalorder %s22, 0
      %p49 = por %p47, %p48
      %s51 = sadd.s32 %s50, 1
      %p54 = scmp.eq.s32.totalorder %s16, 1
      %p55 = scmp.ne.s32.totalorder %s50, %s52
      %p56 = scmp.eq.s32.totalorder %s16, 0
      %p57 = por %p55, %p56
      %p58 = scmp.ne.s32.totalorder %s50, %s52
      %p59 = scmp.eq.s32.totalorder %s21, 1
      %p60 = por %p58, %p59
      %p61 = scmp.ne.s32.totalorder %s52, %s53
      %p62 = scmp.eq.s32.totalorder %s21, 0
      %p63 = por %p61, %p62
      %p64 = scmp.ne.s32.totalorder %s52, %s53
      %p65 = scmp.eq.s32.totalorder %s22, 1
      %p66 = por %p64, %p65
      %p68 = scmp.ne.s32.totalorder %s53, %s67
      %p69 = scmp.eq.s32.totalorder %s22, 0
      %p70 = por %p68, %p69
      %s72 = sadd.s32 %s71, 1
      %p75 = scmp.eq.s32.totalorder %s16, 1
      %p76 = scmp.ne.s32.totalorder %s71, %s73
      %p77 = scmp.eq.s32.totalorder %s16, 0
      %p78 = por %p76, %p77
      %p79 = scmp.ne.s32.totalorder %s71, %s73
      %p80 = scmp.eq.s32.totalorder %s21, 1
      %p81 = por %p79, %p80
      %p82 = scmp.ne.s32.totalorder %s73, %s74
      %p83 = scmp.eq.s32.totalorder %s21, 0
      %p84 = por %p82, %p83
      %p85 = scmp.ne.s32.totalorder %s73, %s74
      %p86 = scmp.eq.s32.totalorder %s22, 1
      %p87 = por %p85, %p86
      %p89 = scmp.ne.s32.totalorder %s74, %s88
      %p90 = scmp.eq.s32.totalorder %s22, 0
      %p91 = por %p89, %p90
      %s93 = sadd.s32 %s92, 1
      %p96 = scmp.eq.s32.totalorder %s16, 1
      %p97 = scmp.ne.s32.totalorder %s92, %s94
      %p98 = scmp.eq.s32.totalorder %s16, 0
      %p99 = por %p97, %p98
      %p100 = scmp.ne.s32.totalorder %s92, %s94
      %p101 = scmp.eq.s32.totalorder %s21, 1
      %p102 = por %p100, %p101
      %p103 = scmp.ne.s32.totalorder %s94, %s95
      %p104 = scmp.eq.s32.totalorder %s21, 0
      %p105 = por %p103, %p104
      %p106 = scmp.ne.s32.totalorder %s94, %s95
      %p107 = scmp.eq.s32.totalorder %s22, 1
      %p108 = por %p106, %p107
      %p110 = scmp.ne.s32.totalorder %s95, %s109
      %p111 = scmp.eq.s32.totalorder %s22, 0
      %p112 = por %p110, %p111
      %s114 = sadd.s32 %s113, 1
      %p117 = scmp.eq.s32.totalorder %s16, 1
      %p118 = scmp.ne.s32.totalorder %s113, %s115
      %p119 = scmp.eq.s32.totalorder %s16, 0
      %p120 = por %p118, %p119
      %p121 = scmp.ne.s32.totalorder %s113, %s115
      %p122 = scmp.eq.s32.totalorder %s21, 1
      %p123 = por %p121, %p122
      %p124 = scmp.ne.s32.totalorder %s115, %s116
      %p125 = scmp.eq.s32.totalorder %s21, 0
      %p126 = por %p124, %p125
      %p127 = scmp.ne.s32.totalorder %s115, %s116
      %p128 = scmp.eq.s32.totalorder %s22, 1
      %p129 = por %p127, %p128
      %p131 = scmp.ne.s32.totalorder %s116, %s130
      %p132 = scmp.eq.s32.totalorder %s22, 0
      %p133 = por %p131, %p132
      %s134 = ssub.s32 %s16, %s23
      %p135 = scmp.eq.s32.totalorder %s134, 0
      %s137 = sadd.s32 %s136, 1
      %s138 = scalar_select %p135, %s136, %s137
      %p141 = pneg %p135
      %p142 = scmp.eq.s32.totalorder %s16, 1
      %p143 = por %p141, %p142
      %p144 = scmp.ne.s32.totalorder %s136, %s139
      %p145 = scmp.eq.s32.totalorder %s16, 0
      %p146 = por %p144, %p145
      %p147 = scmp.ne.s32.totalorder %s136, %s139
      %p148 = scmp.eq.s32.totalorder %s21, 1
      %p149 = por %p147, %p148
      %p150 = scmp.ne.s32.totalorder %s139, %s140
      %p151 = scmp.eq.s32.totalorder %s21, 0
      %p152 = por %p150, %p151
      %p153 = scmp.ne.s32.totalorder %s139, %s140
      %p154 = scmp.eq.s32.totalorder %s22, 1
      %p155 = por %p153, %p154
      %p157 = scmp.ne.s32.totalorder %s140, %s156
      %p158 = scmp.eq.s32.totalorder %s22, 0
      %p159 = por %p157, %p158
      %s160 = ssub.s32 %s16, %s23
      %p161 = scmp.eq.s32.totalorder %s160, 0
      %s163 = sadd.s32 %s162, 1
      %s164 = scalar_select %p161, %s162, %s163
      %p167 = pneg %p161
      %p168 = scmp.eq.s32.totalorder %s16, 1
      %p169 = por %p167, %p168
      %p170 = scmp.ne.s32.totalorder %s162, %s165
      %p171 = scmp.eq.s32.totalorder %s16, 0
      %p172 = por %p170, %p171
      %p173 = scmp.ne.s32.totalorder %s162, %s165
      %p174 = scmp.eq.s32.totalorder %s21, 1
      %p175 = por %p173, %p174
      %p176 = scmp.ne.s32.totalorder %s165, %s166
      %p177 = scmp.eq.s32.totalorder %s21, 0
      %p178 = por %p176, %p177
      %p179 = scmp.ne.s32.totalorder %s165, %s166
      %p180 = scmp.eq.s32.totalorder %s22, 1
      %p181 = por %p179, %p180
      %p183 = scmp.ne.s32.totalorder %s166, %s182
      %p184 = scmp.eq.s32.totalorder %s22, 0
      %p185 = por %p183, %p184
      %p186 = scmp.le.s32.totalorder 1, %s16
      %p187 = scmp.lt.s32.totalorder %s16, 3
      %p188 = pnand %p186, %p187
      %p189 = pneg %p188
      // Predicated region
      $region9: #{transformer_autoencoder_forward.5} parent=5 // pred_check
        _
      $region10: #{transformer_autoencoder_forward.5} parent=5 // pred_check_branch
        %191 = sbr.rel (%p188) target = $region12
      $region11: #{transformer_autoencoder_forward.5} parent=5 // pred_region
        %s192 = ssub.s32 %s16, 1
        // Predicated region
        $region13: #{transformer_autoencoder_forward.5} parent=11 // pred_check
          %p193 = pneg %p63
        $region14: #{transformer_autoencoder_forward.5} parent=11 // pred_check_branch
          %195 = sbr.rel (%p193) target = $region16
        $region15: #{transformer_autoencoder_forward.5} parent=11 // pred_region
          _
        $region16: #{transformer_autoencoder_forward.5} parent=11 // pred_fallthru
          _
        // Predicated region
        $region17: #{transformer_autoencoder_forward.5} parent=11 // pred_check
          %p196 = pneg %p84
        $region18: #{transformer_autoencoder_forward.5} parent=11 // pred_check_branch
          %198 = sbr.rel (%p196) target = $region20
        $region19: #{transformer_autoencoder_forward.5} parent=11 // pred_region
          _
        $region20: #{transformer_autoencoder_forward.5} parent=11 // pred_fallthru
          _
        // Predicated region
        $region21: #{transformer_autoencoder_forward.5} parent=11 // pred_check
          %p199 = pneg %p105
        $region22: #{transformer_autoencoder_forward.5} parent=11 // pred_check_branch
          %201 = sbr.rel (%p199) target = $region24
        $region23: #{transformer_autoencoder_forward.5} parent=11 // pred_region
          _
        $region24: #{transformer_autoencoder_forward.5} parent=11 // pred_fallthru
          _
        // Predicated region
        $region25: #{transformer_autoencoder_forward.5} parent=11 // pred_check
          %p202 = pneg %p126
        $region26: #{transformer_autoencoder_forward.5} parent=11 // pred_check_branch
          %204 = sbr.rel (%p202) target = $region28
        $region27: #{transformer_autoencoder_forward.5} parent=11 // pred_region
          _
        $region28: #{transformer_autoencoder_forward.5} parent=11 // pred_fallthru
          _
      $region12: #{transformer_autoencoder_forward.5} parent=5 // pred_fallthru
        _
      %p205 = scmp.lt.s32.totalorder %s16, 2
      // Predicated region
      $region29: #{transformer_autoencoder_forward.5} parent=5 // pred_check
        %p206 = pneg %p205
      $region30: #{transformer_autoencoder_forward.5} parent=5 // pred_check_branch
        %208 = sbr.rel (%p206) target = $region32
      $region31: #{transformer_autoencoder_forward.5} parent=5 // pred_region
        // Predicated region
        $region33: #{transformer_autoencoder_forward.5} parent=31 // pred_check
          %p209 = pneg %p36
        $region34: #{transformer_autoencoder_forward.5} parent=31 // pred_check_branch
          %211 = sbr.rel (%p209) target = $region36
        $region35: #{transformer_autoencoder_forward.5} parent=31 // pred_region
          %p212 = scmp.lt.s32.totalorder %s16, 1
          %s213 = scalar_select %p212, %s16, 1
          %s214 = smul.addr %s213, 8
          %s215 = scalar_lea.vmem %s0, %s214
        $region36: #{transformer_autoencoder_forward.5} parent=31 // pred_fallthru
          _
      $region32: #{transformer_autoencoder_forward.5} parent=5 // pred_fallthru
        _
      %p216 = scmp.le.s32.totalorder 1, %s16
      %p217 = scmp.lt.s32.totalorder %s16, 3
      %p218 = pnand %p216, %p217
      %p219 = pneg %p218
      // Predicated region
      $region37: #{transformer_autoencoder_forward.5} parent=5 // pred_check
        _
      $region38: #{transformer_autoencoder_forward.5} parent=5 // pred_check_branch
        %221 = sbr.rel (%p218) target = $region40
      $region39: #{transformer_autoencoder_forward.5} parent=5 // pred_region
        %s222 = ssub.s32 %s16, 1
        %p223 = scmp.lt.s32.totalorder %s21, 1
        %s224 = scalar_select %p223, %s21, 1
        %s225 = smul.addr %s224, 8
        %s226 = scalar_lea.vmem %s0, %s225
        %p227 = pneg %p42
        %p228 = pneg %p39
        %p229 = pneg %p63
        %p230 = pneg %p60
        %p231 = pneg %p84
        %p232 = pneg %p81
        %p233 = pneg %p105
        %p234 = pneg %p102
        %p235 = pneg %p126
        %p236 = pneg %p123
        %p237 = pneg %p152
        %p238 = pneg %p149
        %s239 = sand.u32 %s139, 1
        %s240 = scalar_lea.sflag [#allocation3], %s239
        %s241 = sand.u32 %s139, 1
        %s242 = scalar_lea.vmem [#allocation2], %s241
        %p243 = pneg %p178
        %p244 = pneg %p175
        %p245 = scmp.lt.s32.totalorder %s21, 1
        %s246 = scalar_select %p245, %s21, 1
        %s247 = scalar_lea.vmem %s6, %s246
        %p248 = scmp.lt.s32.totalorder %s21, 1
        %s249 = scalar_select %p248, %s21, 1
        %s250 = smul.addr %s249, 8
        %s251 = scalar_lea.vmem %s0, %s250
        %p252 = scmp.lt.s32.totalorder %s21, 1
        %s253 = scalar_select %p252, %s21, 1
        %s254 = scalar_lea.vmem %s6, %s253
        %v256 = vld [vmem:[%s251] sm:$0xff]
        %vm257 = vcmask 261120
        %v258 = vsel %vm257, %v256, 0.0
        %v259 = vrot.slane %v258, 4
        %v260 = vadd.f32 %v258, %v259
        %v261 = vrot.slane %v260, 2
        %v262 = vadd.f32 %v260, %v261
        %v263 = vrot.slane %v262, 1
        %v264 = vadd.f32 %v262, %v263
        %v265 = vrcp.pop 8.0
        %v266 = vmul.f32 %v264, %v265
        %v267 = vld [vmem:[%s1] sm:$0xf]
        %v268 = vld [vmem:[%s1 + $0x4] sm:$0xf]
        %v269 = vld [vmem:[%s1 + $0x8] sm:$0xf]
        %v270 = vld [vmem:[%s1 + $0xc] sm:$0xf]
        %v271 = vpack.c.bf16 %v266, %v266
        %v272 = vld [vmem:[%s2] sm:$0x1]
        %v277 = vunpack.c.l.b16 %v267
        %v278 = vunpack.c.l.b16 %v268
        %v279 = vunpack.c.l.b16 %v269
        %v280 = vunpack.c.l.b16 %v270
        %v281 = vpack.c.b16 %v278, %v277
        %v282 = vpack.c.b16 %v280, %v279
        %v286 = vsel %vm257, %v271, 0
        %288 = vmatprep.subr.bf16.mxu0 0
        %289 = vmatpush1.bf16.msra.mxu0 %v281
        %290 = vmatprep.subr.bf16.mxu0 0
        %291 = vmatpush1.bf16.msra.mxu0 %v282
        %292 = vmatprep.subr.bf16.mxu0 0
        %293 = vmatpush1.bf16.msra.mxu0 0
        %294 = vmatprep.subr.bf16.mxu0 0
        %295 = vmatpush1.bf16.msra.mxu0 0
        %296 = vmatprep.subr.bf16.mxu0 0
        %297 = vmatpush1.bf16.msra.mxu0 0
        %298 = vmatprep.subr.bf16.mxu0 0
        %299 = vmatpush1.bf16.msra.mxu0 0
        %300 = vmatprep.subr.bf16.mxu0 0
        %301 = vmatpush1.bf16.msra.mxu0 0
        %302 = vmatprep.subr.bf16.mxu0 0
        %303 = vmatpush1.bf16.msra.mxu0 0
        %304 = vmatprep.subr.bf16.mxu0 0
        %305 = vmatpush1.bf16.msra.mxu0 0
        %306 = vmatprep.subr.bf16.mxu0 0
        %307 = vmatpush1.bf16.msra.mxu0 0
        %308 = vmatprep.subr.bf16.mxu0 0
        %309 = vmatpush1.bf16.msra.mxu0 0
        %310 = vmatprep.subr.bf16.mxu0 0
        %311 = vmatpush1.bf16.msra.mxu0 0
        %312 = vmatprep.subr.bf16.mxu0 0
        %313 = vmatpush1.bf16.msra.mxu0 0
        %314 = vmatprep.subr.bf16.mxu0 0
        %315 = vmatpush1.bf16.msra.mxu0 0
        %316 = vmatprep.subr.bf16.mxu0 0
        %317 = vmatpush1.bf16.msra.mxu0 0
        %318 = vmatprep.subr.bf16.mxu0 0
        %319 = vmatpush1.bf16.msra.mxu0 0
        %320 = vmatprep.mubr.bf16.mxu0 0
        %321 = vmatmul.mubr.bf16.gmra.mrb[0].mxu0 %v286
        %v322 = vpop.f32.mrb[0].mxu0
        %v323 = vadd.f32 %v272, %v322
        %v324 = vpop.f32.mrb[0].mxu0
        %v325 = vpop.f32.mrb[0].mxu0
        %v326 = vpop.f32.mrb[0].mxu0
        %327 = vdwg.mxu0
        %vm328 = vcmask 253952
        %329 = vst.msk [vmem:[%s242] sm:$0x1] %vm328, %v323
        %v330 = vld [vmem:[%s3] sm:$0xf]
        %v331 = vld [vmem:[%s3 + $0x4] sm:$0xf]
        %v332 = vld [vmem:[%s3 + $0x8] sm:$0xf]
        %v333 = vld [vmem:[%s3 + $0xc] sm:$0xf]
        %v334 = vpack.c.bf16 %v323, %v323
        %v335 = vld [vmem:[%s4] sm:$0x1]
        %v340 = vunpack.c.l.b16 %v330
        %v341 = vunpack.c.l.b16 %v331
        %v342 = vunpack.c.l.b16 %v332
        %v343 = vunpack.c.l.b16 %v333
        %v344 = vpack.c.b16 %v341, %v340
        %v345 = vpack.c.b16 %v343, %v342
        %v349 = vsel %vm257, %v334, 0
        %351 = vmatprep.subr.bf16.mxu0 0
        %352 = vmatpush1.bf16.msra.mxu0 %v344
        %353 = vmatprep.subr.bf16.mxu0 0
        %354 = vmatpush1.bf16.msra.mxu0 %v345
        %355 = vmatprep.subr.bf16.mxu0 0
        %356 = vmatpush1.bf16.msra.mxu0 0
        %357 = vmatprep.subr.bf16.mxu0 0
        %358 = vmatpush1.bf16.msra.mxu0 0
        %359 = vmatprep.subr.bf16.mxu0 0
        %360 = vmatpush1.bf16.msra.mxu0 0
        %361 = vmatprep.subr.bf16.mxu0 0
        %362 = vmatpush1.bf16.msra.mxu0 0
        %363 = vmatprep.subr.bf16.mxu0 0
        %364 = vmatpush1.bf16.msra.mxu0 0
        %365 = vmatprep.subr.bf16.mxu0 0
        %366 = vmatpush1.bf16.msra.mxu0 0
        %367 = vmatprep.subr.bf16.mxu0 0
        %368 = vmatpush1.bf16.msra.mxu0 0
        %369 = vmatprep.subr.bf16.mxu0 0
        %370 = vmatpush1.bf16.msra.mxu0 0
        %371 = vmatprep.subr.bf16.mxu0 0
        %372 = vmatpush1.bf16.msra.mxu0 0
        %373 = vmatprep.subr.bf16.mxu0 0
        %374 = vmatpush1.bf16.msra.mxu0 0
        %375 = vmatprep.subr.bf16.mxu0 0
        %376 = vmatpush1.bf16.msra.mxu0 0
        %377 = vmatprep.subr.bf16.mxu0 0
        %378 = vmatpush1.bf16.msra.mxu0 0
        %379 = vmatprep.subr.bf16.mxu0 0
        %380 = vmatpush1.bf16.msra.mxu0 0
        %381 = vmatprep.subr.bf16.mxu0 0
        %382 = vmatpush1.bf16.msra.mxu0 0
        %383 = vmatprep.mubr.bf16.mxu0 0
        %384 = vmatmul.mubr.bf16.gmra.mrb[0].mxu0 %v349
        %v385 = vpop.f32.mrb[0].mxu0
        %v386 = vadd.f32 %v335, %v385
        %v387 = vpop.f32.mrb[0].mxu0
        %v388 = vpop.f32.mrb[0].mxu0
        %v389 = vpop.f32.mrb[0].mxu0
        %390 = vdwg.mxu0
        %391 = vst.msk [vmem:[%s254] sm:$0x1] %vm328, %v386
        %s392 = sand.u32 %s139, 1
        %s393 = scalar_lea.sflag [#allocation3], %s392
        %s394 = sand.u32 %s139, 1
        %s395 = scalar_lea.vmem [#allocation2], %s394
        %p396 = scmp.lt.s32.totalorder %s21, 1
        %s397 = scalar_select %p396, %s21, 1
        %s398 = scalar_lea.vmem %s6, %s397
        // Predicated region
        $region41: #{transformer_autoencoder_forward.5} parent=39 // pred_check
          %p399 = pneg %p149
        $region42: #{transformer_autoencoder_forward.5} parent=39 // pred_check_branch
          %401 = sbr.rel (%p399) target = $region44
        $region43: #{transformer_autoencoder_forward.5} parent=39 // pred_region
          %s403 = ssub.s32 16, 16
          %404 = vsyncadd %s393, %s403
          %s405 = smul.addr %s21, 16
          %s406 = scalar_lea.hbm %s5, %s405
          %s408 = sshll.u32 %s395, 4
          %s409 = int_to_ptr.vmem [resolvable:$true] %s408
          %411 = dma.vmem_to_hbm [thread:$0]  %s409, 16, %s406, %s393
        $region44: #{transformer_autoencoder_forward.5} parent=39 // pred_fallthru
          _
        // Predicated region
        $region45: #{transformer_autoencoder_forward.5} parent=39 // pred_check
          %p412 = pneg %p175
        $region46: #{transformer_autoencoder_forward.5} parent=39 // pred_check_branch
          %414 = sbr.rel (%p412) target = $region48
        $region47: #{transformer_autoencoder_forward.5} parent=39 // pred_region
          _
        $region48: #{transformer_autoencoder_forward.5} parent=39 // pred_fallthru
          _
      $region40: #{transformer_autoencoder_forward.5} parent=5 // pred_fallthru
        _
      %p415 = scmp.le.s32.totalorder 2, %s16
      // Predicated region
      $region49: #{transformer_autoencoder_forward.5} parent=5 // pred_check
        %p416 = pneg %p415
      $region50: #{transformer_autoencoder_forward.5} parent=5 // pred_check_branch
        %418 = sbr.rel (%p416) target = $region52
      $region51: #{transformer_autoencoder_forward.5} parent=5 // pred_region
        %s419 = ssub.s32 %s16, 2
        // Predicated region
        $region53: #{transformer_autoencoder_forward.5} parent=51 // pred_check
          %p420 = pneg %p155
        $region54: #{transformer_autoencoder_forward.5} parent=51 // pred_check_branch
          %422 = sbr.rel (%p420) target = $region56
        $region55: #{transformer_autoencoder_forward.5} parent=51 // pred_region
          %s423 = sand.u32 %s140, 1
          %s424 = scalar_lea.sflag [#allocation3], %s423
          %s425 = sand.u32 %s140, 1
          %s426 = scalar_lea.vmem [#allocation2], %s425
          %427 = dma.done %s424, 16
        $region56: #{transformer_autoencoder_forward.5} parent=51 // pred_fallthru
          _
        // Predicated region
        $region57: #{transformer_autoencoder_forward.5} parent=51 // pred_check
          %p428 = pneg %p181
        $region58: #{transformer_autoencoder_forward.5} parent=51 // pred_check_branch
          %430 = sbr.rel (%p428) target = $region60
        $region59: #{transformer_autoencoder_forward.5} parent=51 // pred_region
          %p431 = scmp.lt.s32.totalorder %s22, 1
          %s432 = scalar_select %p431, %s22, 1
          %s433 = scalar_lea.vmem %s6, %s432
        $region60: #{transformer_autoencoder_forward.5} parent=51 // pred_fallthru
          _
      $region52: #{transformer_autoencoder_forward.5} parent=5 // pred_fallthru
        _
    $region6: #{transformer_autoencoder_forward.5} parent=1 // loop_footer
      %s20 = sadd.s32 1, %s16
    $region7: #{transformer_autoencoder_forward.5} parent=1 // loop_footer_branch
      %15 = sbr.rel target = $region3
    $region8: #{transformer_autoencoder_forward.5} parent=1 // loop_exit
      _
    %434 = vsyncpa [#allocation3], 1
    %s435 = scalar_lea.sflag [#allocation3], 1
    %436 = vsyncpa %s435, 1

// kernel: transformer_autoencoder_forward.3
$region0: #{transformer_autoencoder_forward.3}
  #allocation0 [shape = 'u32[]', space=smem, size = 0x4, offset = 0x4, fixed_abs, tag = 'smem constant byte address 0x4 - core index']
  #allocation1 [shape = 'u32[144,128]{1,0:T(1,128)}', space=vmem, size = 0x12000, scoped, tag = 'internal scratch']
  %s0 = inlined_call_operand.vmem [shape: f32[2,8,4], index: 0, kind: input, shape index: {}]
  %s1 = inlined_call_operand.vmem [shape: bf16[4,32], index: 1, kind: input, shape index: {}]
  %s2 = inlined_call_operand.vmem [shape: f32[8,32], index: 2, kind: input, shape index: {}]
  %s3 = inlined_call_operand.vmem [shape: f32[2,8,32], index: 3, kind: output, shape index: {}]
  %s4 = sld [smem:[#allocation0]]
  $region45: #{transformer_autoencoder_forward.3} parent=0
    _
  %s6 = ssub.s32 1, %s4
  %s7 = scalar_select 0, %s6, %s4
  loop: start=0, step=1, limit=4
  $region2: #{transformer_autoencoder_forward.3} parent=0 // loop_pre_header
    _
  $region3: #{transformer_autoencoder_forward.3} parent=0 // loop_header
    %s9 = sphi 0, %s13
    %p10 = scmp.ge.s32.totalorder %s9, 4
    %s19 = sphi 0, %s21
    %s22 = sphi 0, %s19
    %s23 = sphi 0, %s22
    %s39 = sphi 0, %s23
    %s43 = sphi 0, %s43
    %s45 = sphi 0, %s43
    %s46 = sphi 0, %s45
    %s60 = sphi 0, %s46
    %s64 = sphi 0, %s64
    %s66 = sphi 0, %s64
    %s67 = sphi 0, %s66
    %s81 = sphi 0, %s67
    %s87 = sphi 0, %s89
    %s90 = sphi 0, %s87
    %s91 = sphi 0, %s90
    %s107 = sphi 0, %s91
  $region4: #{transformer_autoencoder_forward.3} parent=0 // loop_header_branch
    %12 = sbr.rel (%p10) target = $region8
  $region5: #{transformer_autoencoder_forward.3} parent=0 // loop_body
    %s14 = ssub.s32 %s9, 1
    %s15 = ssub.s32 %s9, 2
    %s16 = sadd.s32 %s9, 1
    %s17 = ssub.s32 %s9, %s16
    %p18 = scmp.eq.s32.totalorder %s17, 0
    %s20 = sadd.s32 %s19, 1
    %s21 = scalar_select %p18, %s19, %s20
    %p24 = pneg %p18
    %p25 = scmp.eq.s32.totalorder %s9, 1
    %p26 = por %p24, %p25
    %p27 = scmp.ne.s32.totalorder %s19, %s22
    %p28 = scmp.eq.s32.totalorder %s9, 0
    %p29 = por %p27, %p28
    %p30 = scmp.ne.s32.totalorder %s19, %s22
    %p31 = scmp.eq.s32.totalorder %s14, 1
    %p32 = por %p30, %p31
    %p33 = scmp.ne.s32.totalorder %s22, %s23
    %p34 = scmp.eq.s32.totalorder %s14, 0
    %p35 = por %p33, %p34
    %p36 = scmp.ne.s32.totalorder %s22, %s23
    %p37 = scmp.eq.s32.totalorder %s15, 1
    %p38 = por %p36, %p37
    %p40 = scmp.ne.s32.totalorder %s23, %s39
    %p41 = scmp.eq.s32.totalorder %s15, 0
    %p42 = por %p40, %p41
    %s44 = sadd.s32 %s43, 1
    %p47 = scmp.eq.s32.totalorder %s9, 1
    %p48 = scmp.ne.s32.totalorder %s43, %s45
    %p49 = scmp.eq.s32.totalorder %s9, 0
    %p50 = por %p48, %p49
    %p51 = scmp.ne.s32.totalorder %s43, %s45
    %p52 = scmp.eq.s32.totalorder %s14, 1
    %p53 = por %p51, %p52
    %p54 = scmp.ne.s32.totalorder %s45, %s46
    %p55 = scmp.eq.s32.totalorder %s14, 0
    %p56 = por %p54, %p55
    %p57 = scmp.ne.s32.totalorder %s45, %s46
    %p58 = scmp.eq.s32.totalorder %s15, 1
    %p59 = por %p57, %p58
    %p61 = scmp.ne.s32.totalorder %s46, %s60
    %p62 = scmp.eq.s32.totalorder %s15, 0
    %p63 = por %p61, %p62
    %s65 = sadd.s32 %s64, 1
    %p68 = scmp.eq.s32.totalorder %s9, 1
    %p69 = scmp.ne.s32.totalorder %s64, %s66
    %p70 = scmp.eq.s32.totalorder %s9, 0
    %p71 = por %p69, %p70
    %p72 = scmp.ne.s32.totalorder %s64, %s66
    %p73 = scmp.eq.s32.totalorder %s14, 1
    %p74 = por %p72, %p73
    %p75 = scmp.ne.s32.totalorder %s66, %s67
    %p76 = scmp.eq.s32.totalorder %s14, 0
    %p77 = por %p75, %p76
    %p78 = scmp.ne.s32.totalorder %s66, %s67
    %p79 = scmp.eq.s32.totalorder %s15, 1
    %p80 = por %p78, %p79
    %p82 = scmp.ne.s32.totalorder %s67, %s81
    %p83 = scmp.eq.s32.totalorder %s15, 0
    %p84 = por %p82, %p83
    %s85 = ssub.s32 %s9, %s16
    %p86 = scmp.eq.s32.totalorder %s85, 0
    %s88 = sadd.s32 %s87, 1
    %s89 = scalar_select %p86, %s87, %s88
    %p92 = pneg %p86
    %p93 = scmp.eq.s32.totalorder %s9, 1
    %p94 = por %p92, %p93
    %p95 = scmp.ne.s32.totalorder %s87, %s90
    %p96 = scmp.eq.s32.totalorder %s9, 0
    %p97 = por %p95, %p96
    %p98 = scmp.ne.s32.totalorder %s87, %s90
    %p99 = scmp.eq.s32.totalorder %s14, 1
    %p100 = por %p98, %p99
    %p101 = scmp.ne.s32.totalorder %s90, %s91
    %p102 = scmp.eq.s32.totalorder %s14, 0
    %p103 = por %p101, %p102
    %p104 = scmp.ne.s32.totalorder %s90, %s91
    %p105 = scmp.eq.s32.totalorder %s15, 1
    %p106 = por %p104, %p105
    %p108 = scmp.ne.s32.totalorder %s91, %s107
    %p109 = scmp.eq.s32.totalorder %s15, 0
    %p110 = por %p108, %p109
    %p111 = scmp.le.s32.totalorder 1, %s9
    %p112 = scmp.lt.s32.totalorder %s9, 3
    %p113 = pnand %p111, %p112
    %p114 = pneg %p113
    // Predicated region
    $region9: #{transformer_autoencoder_forward.3} parent=5 // pred_check
      _
    $region10: #{transformer_autoencoder_forward.3} parent=5 // pred_check_branch
      %116 = sbr.rel (%p113) target = $region12
    $region11: #{transformer_autoencoder_forward.3} parent=5 // pred_region
      %s117 = ssub.s32 %s9, 1
      // Predicated region
      $region13: #{transformer_autoencoder_forward.3} parent=11 // pred_check
        %p118 = pneg %p56
      $region14: #{transformer_autoencoder_forward.3} parent=11 // pred_check_branch
        %120 = sbr.rel (%p118) target = $region16
      $region15: #{transformer_autoencoder_forward.3} parent=11 // pred_region
        _
      $region16: #{transformer_autoencoder_forward.3} parent=11 // pred_fallthru
        _
      // Predicated region
      $region17: #{transformer_autoencoder_forward.3} parent=11 // pred_check
        %p121 = pneg %p77
      $region18: #{transformer_autoencoder_forward.3} parent=11 // pred_check_branch
        %123 = sbr.rel (%p121) target = $region20
      $region19: #{transformer_autoencoder_forward.3} parent=11 // pred_region
        _
      $region20: #{transformer_autoencoder_forward.3} parent=11 // pred_fallthru
        _
    $region12: #{transformer_autoencoder_forward.3} parent=5 // pred_fallthru
      _
    %p124 = scmp.lt.s32.totalorder %s9, 2
    // Predicated region
    $region21: #{transformer_autoencoder_forward.3} parent=5 // pred_check
      %p125 = pneg %p124
    $region22: #{transformer_autoencoder_forward.3} parent=5 // pred_check_branch
      %127 = sbr.rel (%p125) target = $region24
    $region23: #{transformer_autoencoder_forward.3} parent=5 // pred_region
      // Predicated region
      $region25: #{transformer_autoencoder_forward.3} parent=23 // pred_check
        %p128 = pneg %p29
      $region26: #{transformer_autoencoder_forward.3} parent=23 // pred_check_branch
        %130 = sbr.rel (%p128) target = $region28
      $region27: #{transformer_autoencoder_forward.3} parent=23 // pred_region
        %p131 = scmp.lt.s32.totalorder %s9, 1
        %s132 = scalar_select %p131, %s9, 1
        %s133 = smul.addr %s132, 8
        %s134 = scalar_lea.vmem %s0, %s133
      $region28: #{transformer_autoencoder_forward.3} parent=23 // pred_fallthru
        _
    $region24: #{transformer_autoencoder_forward.3} parent=5 // pred_fallthru
      _
    %p135 = scmp.le.s32.totalorder 1, %s9
    %p136 = scmp.lt.s32.totalorder %s9, 3
    %p137 = pnand %p135, %p136
    %p138 = pneg %p137
    // Predicated region
    $region29: #{transformer_autoencoder_forward.3} parent=5 // pred_check
      _
    $region30: #{transformer_autoencoder_forward.3} parent=5 // pred_check_branch
      %140 = sbr.rel (%p137) target = $region32
    $region31: #{transformer_autoencoder_forward.3} parent=5 // pred_region
      %s141 = ssub.s32 %s9, 1
      %p142 = scmp.lt.s32.totalorder %s14, 1
      %s143 = scalar_select %p142, %s14, 1
      %s144 = smul.addr %s143, 8
      %s145 = scalar_lea.vmem %s0, %s144
      %p146 = pneg %p35
      %p147 = pneg %p32
      %p148 = pneg %p56
      %p149 = pneg %p53
      %p150 = pneg %p77
      %p151 = pneg %p74
      %p152 = pneg %p103
      %p153 = pneg %p100
      %p154 = scmp.lt.s32.totalorder %s14, 1
      %s155 = scalar_select %p154, %s14, 1
      %s156 = smul.addr %s155, 8
      %s157 = scalar_lea.vmem %s3, %s156
      %p158 = scmp.lt.s32.totalorder %s14, 1
      %s159 = scalar_select %p158, %s14, 1
      %s160 = smul.addr %s159, 8
      %s161 = scalar_lea.vmem %s0, %s160
      %p162 = scmp.lt.s32.totalorder %s14, 1
      %s163 = scalar_select %p162, %s14, 1
      %s164 = smul.addr %s163, 8
      %s165 = scalar_lea.vmem %s3, %s164
      %v167 = vld [vmem:[%s161] sm:$0xff]
      %v168 = vld [vmem:[%s1] sm:$0x3]
      %v169 = vpack.c.bf16 %v167, %v167
      %v170 = vld [vmem:[%s2] sm:$0xff]
      %vm171 = vcmask 31744
      %v173 = vsel %vm171, %v169, 0
      %vm175 = vcmask 1041408
      %v177 = vsel %vm175, %v168, 0
      %179 = vmatprep.subr.bf16.mxu0 0
      %180 = vmatpush1.bf16.msra.mxu0 %v177
      %181 = vmatprep.subr.bf16.mxu0 0
      %182 = vmatpush1.bf16.msra.mxu0 0
      %183 = vmatprep.subr.bf16.mxu0 0
      %184 = vmatpush1.bf16.msra.mxu0 0
      %185 = vmatprep.subr.bf16.mxu0 0
      %186 = vmatpush1.bf16.msra.mxu0 0
      %187 = vmatprep.subr.bf16.mxu0 0
      %188 = vmatpush1.bf16.msra.mxu0 0
      %189 = vmatprep.subr.bf16.mxu0 0
      %190 = vmatpush1.bf16.msra.mxu0 0
      %191 = vmatprep.subr.bf16.mxu0 0
      %192 = vmatpush1.bf16.msra.mxu0 0
      %193 = vmatprep.subr.bf16.mxu0 0
      %194 = vmatpush1.bf16.msra.mxu0 0
      %195 = vmatprep.subr.bf16.mxu0 0
      %196 = vmatpush1.bf16.msra.mxu0 0
      %197 = vmatprep.subr.bf16.mxu0 0
      %198 = vmatpush1.bf16.msra.mxu0 0
      %199 = vmatprep.subr.bf16.mxu0 0
      %200 = vmatpush1.bf16.msra.mxu0 0
      %201 = vmatprep.subr.bf16.mxu0 0
      %202 = vmatpush1.bf16.msra.mxu0 0
      %203 = vmatprep.subr.bf16.mxu0 0
      %204 = vmatpush1.bf16.msra.mxu0 0
      %205 = vmatprep.subr.bf16.mxu0 0
      %206 = vmatpush1.bf16.msra.mxu0 0
      %207 = vmatprep.subr.bf16.mxu0 0
      %208 = vmatpush1.bf16.msra.mxu0 0
      %209 = vmatprep.subr.bf16.mxu0 0
      %210 = vmatpush1.bf16.msra.mxu0 0
      %211 = vmatprep.mubr.bf16.mxu0 0
      %212 = vmatmul.mubr.bf16.gmra.mrb[0].mxu0 %v173
      %v213 = vpop.f32.mrb[0].mxu0
      %v214 = vadd.f32 %v170, %v213
      %v215 = vpop.f32.mrb[0].mxu0
      %v216 = vpop.f32.mrb[0].mxu0
      %v217 = vpop.f32.mrb[0].mxu0
      %218 = vdwg.mxu0
      %vm219 = vcmask 261120
      %220 = vst.msk [vmem:[%s165] sm:$0xff] %vm219, %v214
      %p221 = scmp.lt.s32.totalorder %s14, 1
      %s222 = scalar_select %p221, %s14, 1
      %s223 = smul.addr %s222, 8
      %s224 = scalar_lea.vmem %s3, %s223
      // Predicated region
      $region33: #{transformer_autoencoder_forward.3} parent=31 // pred_check
        %p225 = pneg %p100
      $region34: #{transformer_autoencoder_forward.3} parent=31 // pred_check_branch
        %227 = sbr.rel (%p225) target = $region36
      $region35: #{transformer_autoencoder_forward.3} parent=31 // pred_region
        _
      $region36: #{transformer_autoencoder_forward.3} parent=31 // pred_fallthru
        _
    $region32: #{transformer_autoencoder_forward.3} parent=5 // pred_fallthru
      _
    %p228 = scmp.le.s32.totalorder 2, %s9
    // Predicated region
    $region37: #{transformer_autoencoder_forward.3} parent=5 // pred_check
      %p229 = pneg %p228
    $region38: #{transformer_autoencoder_forward.3} parent=5 // pred_check_branch
      %231 = sbr.rel (%p229) target = $region40
    $region39: #{transformer_autoencoder_forward.3} parent=5 // pred_region
      %s232 = ssub.s32 %s9, 2
      // Predicated region
      $region41: #{transformer_autoencoder_forward.3} parent=39 // pred_check
        %p233 = pneg %p106
      $region42: #{transformer_autoencoder_forward.3} parent=39 // pred_check_branch
        %235 = sbr.rel (%p233) target = $region44
      $region43: #{transformer_autoencoder_forward.3} parent=39 // pred_region
        %p236 = scmp.lt.s32.totalorder %s15, 1
        %s237 = scalar_select %p236, %s15, 1
        %s238 = smul.addr %s237, 8
        %s239 = scalar_lea.vmem %s3, %s238
      $region44: #{transformer_autoencoder_forward.3} parent=39 // pred_fallthru
        _
    $region40: #{transformer_autoencoder_forward.3} parent=5 // pred_fallthru
      _
  $region6: #{transformer_autoencoder_forward.3} parent=0 // loop_footer
    %s13 = sadd.s32 1, %s9
  $region7: #{transformer_autoencoder_forward.3} parent=0 // loop_footer_branch
    %8 = sbr.rel target = $region3
  $region8: #{transformer_autoencoder_forward.3} parent=0 // loop_exit
    _

// kernel: transformer_autoencoder_forward.4
$region0: #{transformer_autoencoder_forward.4}
  #allocation0 [shape = 'u32[]', space=smem, size = 0x4, offset = 0x4, fixed_abs, tag = 'smem constant byte address 0x4 - core index']
  #allocation1 [shape = 'u32[144,128]{1,0:T(1,128)}', space=vmem, size = 0x12000, scoped, tag = 'internal scratch']
  #allocation2 [shape = 'f32[8,32]{1,0:T(8,128)}', space=vmem, size = 0x1000, scoped, tag = 'scratch operand']
  %s0 = inlined_call_operand.vmem [shape: f32[2,8,32], index: 0, kind: input, shape index: {}]
  %s1 = inlined_call_operand.vmem [shape: bf16[2,32,96], index: 1, kind: input, shape index: {}]
  %s2 = inlined_call_operand.vmem [shape: f32[2,1,96], index: 2, kind: input, shape index: {}]
  %s3 = inlined_call_operand.vmem [shape: bf16[2,32,32], index: 3, kind: input, shape index: {}]
  %s4 = inlined_call_operand.vmem [shape: bf16[2,32,64], index: 4, kind: input, shape index: {}]
  %s5 = inlined_call_operand.vmem [shape: f32[2,1,64], index: 5, kind: input, shape index: {}]
  %s6 = inlined_call_operand.vmem [shape: bf16[2,64,32], index: 6, kind: input, shape index: {}]
  %s7 = inlined_call_operand.vmem [shape: f32[2,6,32], index: 7, kind: input, shape index: {}]
  %s8 = inlined_call_operand.vmem [shape: f32[2,8,32], index: 8, kind: output, shape index: {}]
  %s9 = sld [smem:[#allocation0]]
  $region73: #{transformer_autoencoder_forward.4} parent=0
    _
  %s11 = ssub.s32 1, %s9
  %s12 = scalar_select 0, %s11, %s9
  loop: start=0, step=1, limit=6
  $region2: #{transformer_autoencoder_forward.4} parent=0 // loop_pre_header
    _
  $region3: #{transformer_autoencoder_forward.4} parent=0 // loop_header
    %s14 = sphi 0, %s18
    %p15 = scmp.ge.s32.totalorder %s14, 6
    %s21 = sphi 0, %s33
    %s22 = sphi 0, %s29
    %s23 = sphi 0, %s21
    %s24 = sphi 0, %s22
    %s25 = sphi 0, %s23
    %s26 = sphi 0, %s24
    %s36 = sphi 0, %s38
    %s39 = sphi 0, %s36
    %s40 = sphi 0, %s39
    %s56 = sphi 0, %s40
    %s62 = sphi 0, %s64
    %s65 = sphi 0, %s62
    %s66 = sphi 0, %s65
    %s82 = sphi 0, %s66
    %s88 = sphi 0, %s90
    %s91 = sphi 0, %s88
    %s92 = sphi 0, %s91
    %s108 = sphi 0, %s92
    %s114 = sphi 0, %s116
    %s117 = sphi 0, %s114
    %s118 = sphi 0, %s117
    %s134 = sphi 0, %s118
    %s140 = sphi 0, %s142
    %s143 = sphi 0, %s140
    %s144 = sphi 0, %s143
    %s160 = sphi 0, %s144
    %s166 = sphi 0, %s168
    %s169 = sphi 0, %s166
    %s170 = sphi 0, %s169
    %s186 = sphi 0, %s170
    %s192 = sphi 0, %s194
    %s195 = sphi 0, %s192
    %s196 = sphi 0, %s195
    %s212 = sphi 0, %s196
    %s218 = sphi 0, %s220
    %s221 = sphi 0, %s218
    %s222 = sphi 0, %s221
    %s238 = sphi 0, %s222
    %s244 = sphi 0, %s246
    %s247 = sphi 0, %s244
    %s248 = sphi 0, %s247
    %s264 = sphi 0, %s248
  $region4: #{transformer_autoencoder_forward.4} parent=0 // loop_header_branch
    %17 = sbr.rel (%p15) target = $region8
  $region5: #{transformer_autoencoder_forward.4} parent=0 // loop_body
    %s19 = ssub.s32 %s14, 1
    %s20 = ssub.s32 %s14, 2
    %s27 = sadd.s32 1, %s22
    %p28 = scmp.ge.s32.totalorder %s27, 2
    %s29 = scalar_select %p28, 0, %s27
    %s30 = sadd.s32 1, %s21
    %s31 = scalar_select %p28, %s30, %s21
    %p32 = scmp.ge.s32.totalorder %s31, 2
    %s33 = scalar_select %p32, 0, %s31
    %s34 = ssub.s32 %s21, %s33
    %p35 = scmp.eq.s32.totalorder %s34, 0
    %s37 = sadd.s32 %s36, 1
    %s38 = scalar_select %p35, %s36, %s37
    %p41 = pneg %p35
    %p42 = scmp.eq.s32.totalorder %s14, 3
    %p43 = por %p41, %p42
    %p44 = scmp.ne.s32.totalorder %s36, %s39
    %p45 = scmp.eq.s32.totalorder %s14, 0
    %p46 = por %p44, %p45
    %p47 = scmp.ne.s32.totalorder %s36, %s39
    %p48 = scmp.eq.s32.totalorder %s19, 3
    %p49 = por %p47, %p48
    %p50 = scmp.ne.s32.totalorder %s39, %s40
    %p51 = scmp.eq.s32.totalorder %s19, 0
    %p52 = por %p50, %p51
    %p53 = scmp.ne.s32.totalorder %s39, %s40
    %p54 = scmp.eq.s32.totalorder %s20, 3
    %p55 = por %p53, %p54
    %p57 = scmp.ne.s32.totalorder %s40, %s56
    %p58 = scmp.eq.s32.totalorder %s20, 0
    %p59 = por %p57, %p58
    %s60 = ssub.s32 %s22, %s29
    %p61 = scmp.eq.s32.totalorder %s60, 0
    %s63 = sadd.s32 %s62, 1
    %s64 = scalar_select %p61, %s62, %s63
    %p67 = pneg %p61
    %p68 = scmp.eq.s32.totalorder %s14, 3
    %p69 = por %p67, %p68
    %p70 = scmp.ne.s32.totalorder %s62, %s65
    %p71 = scmp.eq.s32.totalorder %s14, 0
    %p72 = por %p70, %p71
    %p73 = scmp.ne.s32.totalorder %s62, %s65
    %p74 = scmp.eq.s32.totalorder %s19, 3
    %p75 = por %p73, %p74
    %p76 = scmp.ne.s32.totalorder %s65, %s66
    %p77 = scmp.eq.s32.totalorder %s19, 0
    %p78 = por %p76, %p77
    %p79 = scmp.ne.s32.totalorder %s65, %s66
    %p80 = scmp.eq.s32.totalorder %s20, 3
    %p81 = por %p79, %p80
    %p83 = scmp.ne.s32.totalorder %s66, %s82
    %p84 = scmp.eq.s32.totalorder %s20, 0
    %p85 = por %p83, %p84
    %s86 = ssub.s32 %s22, %s29
    %p87 = scmp.eq.s32.totalorder %s86, 0
    %s89 = sadd.s32 %s88, 1
    %s90 = scalar_select %p87, %s88, %s89
    %p93 = pneg %p87
    %p94 = scmp.eq.s32.totalorder %s14, 3
    %p95 = por %p93, %p94
    %p96 = scmp.ne.s32.totalorder %s88, %s91
    %p97 = scmp.eq.s32.totalorder %s14, 0
    %p98 = por %p96, %p97
    %p99 = scmp.ne.s32.totalorder %s88, %s91
    %p100 = scmp.eq.s32.totalorder %s19, 3
    %p101 = por %p99, %p100
    %p102 = scmp.ne.s32.totalorder %s91, %s92
    %p103 = scmp.eq.s32.totalorder %s19, 0
    %p104 = por %p102, %p103
    %p105 = scmp.ne.s32.totalorder %s91, %s92
    %p106 = scmp.eq.s32.totalorder %s20, 3
    %p107 = por %p105, %p106
    %p109 = scmp.ne.s32.totalorder %s92, %s108
    %p110 = scmp.eq.s32.totalorder %s20, 0
    %p111 = por %p109, %p110
    %s112 = ssub.s32 %s22, %s29
    %p113 = scmp.eq.s32.totalorder %s112, 0
    %s115 = sadd.s32 %s114, 1
    %s116 = scalar_select %p113, %s114, %s115
    %p119 = pneg %p113
    %p120 = scmp.eq.s32.totalorder %s14, 3
    %p121 = por %p119, %p120
    %p122 = scmp.ne.s32.totalorder %s114, %s117
    %p123 = scmp.eq.s32.totalorder %s14, 0
    %p124 = por %p122, %p123
    %p125 = scmp.ne.s32.totalorder %s114, %s117
    %p126 = scmp.eq.s32.totalorder %s19, 3
    %p127 = por %p125, %p126
    %p128 = scmp.ne.s32.totalorder %s117, %s118
    %p129 = scmp.eq.s32.totalorder %s19, 0
    %p130 = por %p128, %p129
    %p131 = scmp.ne.s32.totalorder %s117, %s118
    %p132 = scmp.eq.s32.totalorder %s20, 3
    %p133 = por %p131, %p132
    %p135 = scmp.ne.s32.totalorder %s118, %s134
    %p136 = scmp.eq.s32.totalorder %s20, 0
    %p137 = por %p135, %p136
    %s138 = ssub.s32 %s22, %s29
    %p139 = scmp.eq.s32.totalorder %s138, 0
    %s141 = sadd.s32 %s140, 1
    %s142 = scalar_select %p139, %s140, %s141
    %p145 = pneg %p139
    %p146 = scmp.eq.s32.totalorder %s14, 3
    %p147 = por %p145, %p146
    %p148 = scmp.ne.s32.totalorder %s140, %s143
    %p149 = scmp.eq.s32.totalorder %s14, 0
    %p150 = por %p148, %p149
    %p151 = scmp.ne.s32.totalorder %s140, %s143
    %p152 = scmp.eq.s32.totalorder %s19, 3
    %p153 = por %p151, %p152
    %p154 = scmp.ne.s32.totalorder %s143, %s144
    %p155 = scmp.eq.s32.totalorder %s19, 0
    %p156 = por %p154, %p155
    %p157 = scmp.ne.s32.totalorder %s143, %s144
    %p158 = scmp.eq.s32.totalorder %s20, 3
    %p159 = por %p157, %p158
    %p161 = scmp.ne.s32.totalorder %s144, %s160
    %p162 = scmp.eq.s32.totalorder %s20, 0
    %p163 = por %p161, %p162
    %s164 = ssub.s32 %s22, %s29
    %p165 = scmp.eq.s32.totalorder %s164, 0
    %s167 = sadd.s32 %s166, 1
    %s168 = scalar_select %p165, %s166, %s167
    %p171 = pneg %p165
    %p172 = scmp.eq.s32.totalorder %s14, 3
    %p173 = por %p171, %p172
    %p174 = scmp.ne.s32.totalorder %s166, %s169
    %p175 = scmp.eq.s32.totalorder %s14, 0
    %p176 = por %p174, %p175
    %p177 = scmp.ne.s32.totalorder %s166, %s169
    %p178 = scmp.eq.s32.totalorder %s19, 3
    %p179 = por %p177, %p178
    %p180 = scmp.ne.s32.totalorder %s169, %s170
    %p181 = scmp.eq.s32.totalorder %s19, 0
    %p182 = por %p180, %p181
    %p183 = scmp.ne.s32.totalorder %s169, %s170
    %p184 = scmp.eq.s32.totalorder %s20, 3
    %p185 = por %p183, %p184
    %p187 = scmp.ne.s32.totalorder %s170, %s186
    %p188 = scmp.eq.s32.totalorder %s20, 0
    %p189 = por %p187, %p188
    %s190 = ssub.s32 %s22, %s29
    %p191 = scmp.eq.s32.totalorder %s190, 0
    %s193 = sadd.s32 %s192, 1
    %s194 = scalar_select %p191, %s192, %s193
    %p197 = pneg %p191
    %p198 = scmp.eq.s32.totalorder %s14, 3
    %p199 = por %p197, %p198
    %p200 = scmp.ne.s32.totalorder %s192, %s195
    %p201 = scmp.eq.s32.totalorder %s14, 0
    %p202 = por %p200, %p201
    %p203 = scmp.ne.s32.totalorder %s192, %s195
    %p204 = scmp.eq.s32.totalorder %s19, 3
    %p205 = por %p203, %p204
    %p206 = scmp.ne.s32.totalorder %s195, %s196
    %p207 = scmp.eq.s32.totalorder %s19, 0
    %p208 = por %p206, %p207
    %p209 = scmp.ne.s32.totalorder %s195, %s196
    %p210 = scmp.eq.s32.totalorder %s20, 3
    %p211 = por %p209, %p210
    %p213 = scmp.ne.s32.totalorder %s196, %s212
    %p214 = scmp.eq.s32.totalorder %s20, 0
    %p215 = por %p213, %p214
    %s216 = ssub.s32 %s22, %s29
    %p217 = scmp.eq.s32.totalorder %s216, 0
    %s219 = sadd.s32 %s218, 1
    %s220 = scalar_select %p217, %s218, %s219
    %p223 = pneg %p217
    %p224 = scmp.eq.s32.totalorder %s14, 3
    %p225 = por %p223, %p224
    %p226 = scmp.ne.s32.totalorder %s218, %s221
    %p227 = scmp.eq.s32.totalorder %s14, 0
    %p228 = por %p226, %p227
    %p229 = scmp.ne.s32.totalorder %s218, %s221
    %p230 = scmp.eq.s32.totalorder %s19, 3
    %p231 = por %p229, %p230
    %p232 = scmp.ne.s32.totalorder %s221, %s222
    %p233 = scmp.eq.s32.totalorder %s19, 0
    %p234 = por %p232, %p233
    %p235 = scmp.ne.s32.totalorder %s221, %s222
    %p236 = scmp.eq.s32.totalorder %s20, 3
    %p237 = por %p235, %p236
    %p239 = scmp.ne.s32.totalorder %s222, %s238
    %p240 = scmp.eq.s32.totalorder %s20, 0
    %p241 = por %p239, %p240
    %s242 = ssub.s32 %s21, %s33
    %p243 = scmp.eq.s32.totalorder %s242, 0
    %s245 = sadd.s32 %s244, 1
    %s246 = scalar_select %p243, %s244, %s245
    %p249 = pneg %p243
    %p250 = scmp.eq.s32.totalorder %s14, 3
    %p251 = por %p249, %p250
    %p252 = scmp.ne.s32.totalorder %s244, %s247
    %p253 = scmp.eq.s32.totalorder %s14, 0
    %p254 = por %p252, %p253
    %p255 = scmp.ne.s32.totalorder %s244, %s247
    %p256 = scmp.eq.s32.totalorder %s19, 3
    %p257 = por %p255, %p256
    %p258 = scmp.ne.s32.totalorder %s247, %s248
    %p259 = scmp.eq.s32.totalorder %s19, 0
    %p260 = por %p258, %p259
    %p261 = scmp.ne.s32.totalorder %s247, %s248
    %p262 = scmp.eq.s32.totalorder %s20, 3
    %p263 = por %p261, %p262
    %p265 = scmp.ne.s32.totalorder %s248, %s264
    %p266 = scmp.eq.s32.totalorder %s20, 0
    %p267 = por %p265, %p266
    %p268 = scmp.le.s32.totalorder 1, %s14
    %p269 = scmp.lt.s32.totalorder %s14, 5
    %p270 = pnand %p268, %p269
    %p271 = pneg %p270
    // Predicated region
    $region9: #{transformer_autoencoder_forward.4} parent=5 // pred_check
      _
    $region10: #{transformer_autoencoder_forward.4} parent=5 // pred_check_branch
      %273 = sbr.rel (%p270) target = $region12
    $region11: #{transformer_autoencoder_forward.4} parent=5 // pred_region
      %s274 = ssub.s32 %s14, 1
    $region12: #{transformer_autoencoder_forward.4} parent=5 // pred_fallthru
      _
    %p275 = scmp.lt.s32.totalorder %s14, 4
    // Predicated region
    $region13: #{transformer_autoencoder_forward.4} parent=5 // pred_check
      %p276 = pneg %p275
    $region14: #{transformer_autoencoder_forward.4} parent=5 // pred_check_branch
      %278 = sbr.rel (%p276) target = $region16
    $region15: #{transformer_autoencoder_forward.4} parent=5 // pred_region
      // Predicated region
      $region17: #{transformer_autoencoder_forward.4} parent=15 // pred_check
        %p279 = pneg %p46
      $region18: #{transformer_autoencoder_forward.4} parent=15 // pred_check_branch
        %281 = sbr.rel (%p279) target = $region20
      $region19: #{transformer_autoencoder_forward.4} parent=15 // pred_region
        %p282 = scmp.lt.s32.totalorder %s21, 1
        %s283 = scalar_select %p282, %s21, 1
        %s284 = smul.addr %s283, 8
        %s285 = scalar_lea.vmem %s0, %s284
      $region20: #{transformer_autoencoder_forward.4} parent=15 // pred_fallthru
        _
      // Predicated region
      $region21: #{transformer_autoencoder_forward.4} parent=15 // pred_check
        %p286 = pneg %p72
      $region22: #{transformer_autoencoder_forward.4} parent=15 // pred_check_branch
        %288 = sbr.rel (%p286) target = $region24
      $region23: #{transformer_autoencoder_forward.4} parent=15 // pred_region
        %p289 = scmp.lt.s32.totalorder %s22, 1
        %s290 = scalar_select %p289, %s22, 1
        %s291 = smul.addr %s290, 4
        %s292 = smul.addr %s291, 4
        %s293 = scalar_lea.vmem %s1, %s292
      $region24: #{transformer_autoencoder_forward.4} parent=15 // pred_fallthru
        _
      // Predicated region
      $region25: #{transformer_autoencoder_forward.4} parent=15 // pred_check
        %p294 = pneg %p98
      $region26: #{transformer_autoencoder_forward.4} parent=15 // pred_check_branch
        %296 = sbr.rel (%p294) target = $region28
      $region27: #{transformer_autoencoder_forward.4} parent=15 // pred_region
        %p297 = scmp.lt.s32.totalorder %s22, 1
        %s298 = scalar_select %p297, %s22, 1
        %s299 = scalar_lea.vmem %s2, %s298
      $region28: #{transformer_autoencoder_forward.4} parent=15 // pred_fallthru
        _
      // Predicated region
      $region29: #{transformer_autoencoder_forward.4} parent=15 // pred_check
        %p300 = pneg %p124
      $region30: #{transformer_autoencoder_forward.4} parent=15 // pred_check_branch
        %302 = sbr.rel (%p300) target = $region32
      $region31: #{transformer_autoencoder_forward.4} parent=15 // pred_region
        %p303 = scmp.lt.s32.totalorder %s22, 1
        %s304 = scalar_select %p303, %s22, 1
        %s305 = smul.addr %s304, 4
        %s306 = smul.addr %s305, 4
        %s307 = scalar_lea.vmem %s3, %s306
      $region32: #{transformer_autoencoder_forward.4} parent=15 // pred_fallthru
        _
      // Predicated region
      $region33: #{transformer_autoencoder_forward.4} parent=15 // pred_check
        %p308 = pneg %p150
      $region34: #{transformer_autoencoder_forward.4} parent=15 // pred_check_branch
        %310 = sbr.rel (%p308) target = $region36
      $region35: #{transformer_autoencoder_forward.4} parent=15 // pred_region
        %p311 = scmp.lt.s32.totalorder %s22, 1
        %s312 = scalar_select %p311, %s22, 1
        %s313 = smul.addr %s312, 4
        %s314 = smul.addr %s313, 4
        %s315 = scalar_lea.vmem %s4, %s314
      $region36: #{transformer_autoencoder_forward.4} parent=15 // pred_fallthru
        _
      // Predicated region
      $region37: #{transformer_autoencoder_forward.4} parent=15 // pred_check
        %p316 = pneg %p176
      $region38: #{transformer_autoencoder_forward.4} parent=15 // pred_check_branch
        %318 = sbr.rel (%p316) target = $region40
      $region39: #{transformer_autoencoder_forward.4} parent=15 // pred_region
        %p319 = scmp.lt.s32.totalorder %s22, 1
        %s320 = scalar_select %p319, %s22, 1
        %s321 = scalar_lea.vmem %s5, %s320
      $region40: #{transformer_autoencoder_forward.4} parent=15 // pred_fallthru
        _
      // Predicated region
      $region41: #{transformer_autoencoder_forward.4} parent=15 // pred_check
        %p322 = pneg %p202
      $region42: #{transformer_autoencoder_forward.4} parent=15 // pred_check_branch
        %324 = sbr.rel (%p322) target = $region44
      $region43: #{transformer_autoencoder_forward.4} parent=15 // pred_region
        %p325 = scmp.lt.s32.totalorder %s22, 1
        %s326 = scalar_select %p325, %s22, 1
        %s327 = smul.addr %s326, 8
        %s328 = smul.addr %s327, 4
        %s329 = scalar_lea.vmem %s6, %s328
      $region44: #{transformer_autoencoder_forward.4} parent=15 // pred_fallthru
        _
      // Predicated region
      $region45: #{transformer_autoencoder_forward.4} parent=15 // pred_check
        %p330 = pneg %p228
      $region46: #{transformer_autoencoder_forward.4} parent=15 // pred_check_branch
        %332 = sbr.rel (%p330) target = $region48
      $region47: #{transformer_autoencoder_forward.4} parent=15 // pred_region
        %p333 = scmp.lt.s32.totalorder %s22, 1
        %s334 = scalar_select %p333, %s22, 1
        %s335 = smul.addr %s334, 8
        %s336 = scalar_lea.vmem %s7, %s335
      $region48: #{transformer_autoencoder_forward.4} parent=15 // pred_fallthru
        _
    $region16: #{transformer_autoencoder_forward.4} parent=5 // pred_fallthru
      _
    %p337 = scmp.le.s32.totalorder 1, %s14
    %p338 = scmp.lt.s32.totalorder %s14, 5
    %p339 = pnand %p337, %p338
    %p340 = pneg %p339
    // Predicated region
    $region49: #{transformer_autoencoder_forward.4} parent=5 // pred_check
      _
    $region50: #{transformer_autoencoder_forward.4} parent=5 // pred_check_branch
      %342 = sbr.rel (%p339) target = $region52
    $region51: #{transformer_autoencoder_forward.4} parent=5 // pred_region
      %s343 = ssub.s32 %s14, 1
      %p344 = scmp.lt.s32.totalorder %s23, 1
      %s345 = scalar_select %p344, %s23, 1
      %s346 = smul.addr %s345, 8
      %s347 = scalar_lea.vmem %s0, %s346
      %p348 = pneg %p52
      %p349 = pneg %p49
      %p350 = scmp.lt.s32.totalorder %s24, 1
      %s351 = scalar_select %p350, %s24, 1
      %s352 = smul.addr %s351, 4
      %s353 = smul.addr %s352, 4
      %s354 = scalar_lea.vmem %s1, %s353
      %p355 = pneg %p78
      %p356 = pneg %p75
      %p357 = scmp.lt.s32.totalorder %s24, 1
      %s358 = scalar_select %p357, %s24, 1
      %s359 = scalar_lea.vmem %s2, %s358
      %p360 = pneg %p104
      %p361 = pneg %p101
      %p362 = scmp.lt.s32.totalorder %s24, 1
      %s363 = scalar_select %p362, %s24, 1
      %s364 = smul.addr %s363, 4
      %s365 = smul.addr %s364, 4
      %s366 = scalar_lea.vmem %s3, %s365
      %p367 = pneg %p130
      %p368 = pneg %p127
      %p369 = scmp.lt.s32.totalorder %s24, 1
      %s370 = scalar_select %p369, %s24, 1
      %s371 = smul.addr %s370, 4
      %s372 = smul.addr %s371, 4
      %s373 = scalar_lea.vmem %s4, %s372
      %p374 = pneg %p156
      %p375 = pneg %p153
      %p376 = scmp.lt.s32.totalorder %s24, 1
      %s377 = scalar_select %p376, %s24, 1
      %s378 = scalar_lea.vmem %s5, %s377
      %p379 = pneg %p182
      %p380 = pneg %p179
      %p381 = scmp.lt.s32.totalorder %s24, 1
      %s382 = scalar_select %p381, %s24, 1
      %s383 = smul.addr %s382, 8
      %s384 = smul.addr %s383, 4
      %s385 = scalar_lea.vmem %s6, %s384
      %p386 = pneg %p208
      %p387 = pneg %p205
      %p388 = scmp.lt.s32.totalorder %s24, 1
      %s389 = scalar_select %p388, %s24, 1
      %s390 = smul.addr %s389, 8
      %s391 = scalar_lea.vmem %s7, %s390
      %p392 = pneg %p234
      %p393 = pneg %p231
      %p394 = pneg %p260
      %p395 = pneg %p257
      %p396 = scmp.lt.s32.totalorder %s23, 1
      %s397 = scalar_select %p396, %s23, 1
      %s398 = smul.addr %s397, 8
      %s399 = scalar_lea.vmem %s8, %s398
      %p400 = scmp.lt.s32.totalorder %s23, 1
      %s401 = scalar_select %p400, %s23, 1
      %s402 = smul.addr %s401, 8
      %s403 = scalar_lea.vmem %s0, %s402
      %p404 = scmp.lt.s32.totalorder %s24, 1
      %s405 = scalar_select %p404, %s24, 1
      %s406 = smul.addr %s405, 4
      %s407 = smul.addr %s406, 4
      %s408 = scalar_lea.vmem %s1, %s407
      %p409 = scmp.lt.s32.totalorder %s24, 1
      %s410 = scalar_select %p409, %s24, 1
      %s411 = scalar_lea.vmem %s2, %s410
      %p412 = scmp.lt.s32.totalorder %s24, 1
      %s413 = scalar_select %p412, %s24, 1
      %s414 = smul.addr %s413, 4
      %s415 = smul.addr %s414, 4
      %s416 = scalar_lea.vmem %s3, %s415
      %p417 = scmp.lt.s32.totalorder %s24, 1
      %s418 = scalar_select %p417, %s24, 1
      %s419 = smul.addr %s418, 4
      %s420 = smul.addr %s419, 4
      %s421 = scalar_lea.vmem %s4, %s420
      %p422 = scmp.lt.s32.totalorder %s24, 1
      %s423 = scalar_select %p422, %s24, 1
      %s424 = scalar_lea.vmem %s5, %s423
      %p425 = scmp.lt.s32.totalorder %s24, 1
      %s426 = scalar_select %p425, %s24, 1
      %s427 = smul.addr %s426, 8
      %s428 = smul.addr %s427, 4
      %s429 = scalar_lea.vmem %s6, %s428
      %p430 = scmp.lt.s32.totalorder %s24, 1
      %s431 = scalar_select %p430, %s24, 1
      %s432 = smul.addr %s431, 8
      %s433 = scalar_lea.vmem %s7, %s432
      %p434 = scmp.lt.s32.totalorder %s23, 1
      %s435 = scalar_select %p434, %s23, 1
      %s436 = smul.addr %s435, 8
      %s437 = scalar_lea.vmem %s8, %s436
      %p439 = scmp.eq.s32.totalorder %s24, 0
      // Predicated region
      $region53: #{transformer_autoencoder_forward.4} parent=51 // pred_check
        %p440 = pneg %p439
      $region54: #{transformer_autoencoder_forward.4} parent=51 // pred_check_branch
        %442 = sbr.rel (%p440) target = $region56
      $region55: #{transformer_autoencoder_forward.4} parent=51 // pred_region
        %v443 = vld [vmem:[%s403] sm:$0xff]
        %vm444 = vcmask 261120
        %445 = vst.msk [vmem:[#allocation2] sm:$0xff] %vm444, %v443
      $region56: #{transformer_autoencoder_forward.4} parent=51 // pred_fallthru
        _
      %v446 = vld [vmem:[#allocation2] sm:$0xff]
      %v447 = vld [vmem:[%s408] sm:$0xf]
      %v448 = vld [vmem:[%s408 + $0x4] sm:$0xf]
      %v449 = vld [vmem:[%s408 + $0x8] sm:$0xf]
      %v450 = vld [vmem:[%s408 + $0xc] sm:$0xf]
      %v451 = vpack.c.bf16 %v446, %v446
      %v452 = vld [vmem:[%s411] sm:$0x1]
      %v454 = vlaneseq
      %v455 = vshrl.u32 %v454, 7
      %v456 = vsub.s32 0, %v455
      %v457 = vrot.slane %v452, %v456
      %v463 = vunpack.c.l.b16 %v447
      %v464 = vunpack.c.l.b16 %v448
      %v465 = vunpack.c.l.b16 %v449
      %v466 = vunpack.c.l.b16 %v450
      %v467 = vpack.c.b16 %v464, %v463
      %v468 = vpack.c.b16 %v466, %v465
      %vm471 = vcmask 261120
      %v473 = vsel %vm471, %v451, 0
      %475 = vmatprep.subr.bf16.mxu0 0
      %476 = vmatpush1.bf16.msra.mxu0 %v467
      %477 = vmatprep.subr.bf16.mxu0 0
      %478 = vmatpush1.bf16.msra.mxu0 %v468
      %479 = vmatprep.subr.bf16.mxu0 0
      %480 = vmatpush1.bf16.msra.mxu0 0
      %481 = vmatprep.subr.bf16.mxu0 0
      %482 = vmatpush1.bf16.msra.mxu0 0
      %483 = vmatprep.subr.bf16.mxu0 0
      %484 = vmatpush1.bf16.msra.mxu0 0
      %485 = vmatprep.subr.bf16.mxu0 0
      %486 = vmatpush1.bf16.msra.mxu0 0
      %487 = vmatprep.subr.bf16.mxu0 0
      %488 = vmatpush1.bf16.msra.mxu0 0
      %489 = vmatprep.subr.bf16.mxu0 0
      %490 = vmatpush1.bf16.msra.mxu0 0
      %491 = vmatprep.subr.bf16.mxu0 0
      %492 = vmatpush1.bf16.msra.mxu0 0
      %493 = vmatprep.subr.bf16.mxu0 0
      %494 = vmatpush1.bf16.msra.mxu0 0
      %495 = vmatprep.subr.bf16.mxu0 0
      %496 = vmatpush1.bf16.msra.mxu0 0
      %497 = vmatprep.subr.bf16.mxu0 0
      %498 = vmatpush1.bf16.msra.mxu0 0
      %499 = vmatprep.subr.bf16.mxu0 0
      %500 = vmatpush1.bf16.msra.mxu0 0
      %501 = vmatprep.subr.bf16.mxu0 0
      %502 = vmatpush1.bf16.msra.mxu0 0
      %503 = vmatprep.subr.bf16.mxu0 0
      %504 = vmatpush1.bf16.msra.mxu0 0
      %505 = vmatprep.subr.bf16.mxu0 0
      %506 = vmatpush1.bf16.msra.mxu0 0
      %507 = vmatprep.mubr.bf16.mxu0 0
      %508 = vmatmul.mubr.bf16.gmra.mrb[0].mxu0 %v473
      %v509 = vpop.f32.mrb[0].mxu0
      %v510 = vadd.f32 %v457, %v509
      %v511 = vpop.f32.mrb[0].mxu0
      %v512 = vpop.f32.mrb[0].mxu0
      %v513 = vpop.f32.mrb[0].mxu0
      %514 = vdwg.mxu0
      %v515 = vpack.c.bf16 %v510, %v510
      %517 = vrot.lane.b32.xlu0 %v515, 96
      %v518 = vpop.permute.xlu0 %517
      %vm519 = vcmask 64512
      %v521 = vsel %vm519, %v515, 0
      %v524 = vsel %vm519, %v518, 0
      %526 = vmatprep.subr.bf16.mxu0 0
      %527 = vmatpush1.bf16.xpose.msra.mxu0 %v524
      %528 = vmatprep.subr.bf16.mxu0 0
      %529 = vmatpush1.bf16.xpose.msra.mxu0 0
      %530 = vmatprep.subr.bf16.mxu0 0
      %531 = vmatpush1.bf16.xpose.msra.mxu0 0
      %532 = vmatprep.subr.bf16.mxu0 0
      %533 = vmatpush1.bf16.xpose.msra.mxu0 0
      %534 = vmatprep.subr.bf16.mxu0 0
      %535 = vmatpush1.bf16.xpose.msra.mxu0 0
      %536 = vmatprep.subr.bf16.mxu0 0
      %537 = vmatpush1.bf16.xpose.msra.mxu0 0
      %538 = vmatprep.subr.bf16.mxu0 0
      %539 = vmatpush1.bf16.xpose.msra.mxu0 0
      %540 = vmatprep.subr.bf16.mxu0 0
      %541 = vmatpush1.bf16.xpose.msra.mxu0 0
      %542 = vmatprep.subr.bf16.mxu0 0
      %543 = vmatpush1.bf16.xpose.msra.mxu0 0
      %544 = vmatprep.subr.bf16.mxu0 0
      %545 = vmatpush1.bf16.xpose.msra.mxu0 0
      %546 = vmatprep.subr.bf16.mxu0 0
      %547 = vmatpush1.bf16.xpose.msra.mxu0 0
      %548 = vmatprep.subr.bf16.mxu0 0
      %549 = vmatpush1.bf16.xpose.msra.mxu0 0
      %550 = vmatprep.subr.bf16.mxu0 0
      %551 = vmatpush1.bf16.xpose.msra.mxu0 0
      %552 = vmatprep.subr.bf16.mxu0 0
      %553 = vmatpush1.bf16.xpose.msra.mxu0 0
      %554 = vmatprep.subr.bf16.mxu0 0
      %555 = vmatpush1.bf16.xpose.msra.mxu0 0
      %556 = vmatprep.subr.bf16.mxu0 0
      %557 = vmatpush1.bf16.xpose.msra.mxu0 0
      %558 = vmatprep.mubr.bf16.mxu0 0
      %559 = vmatmul.mubr.bf16.gmra.mrb[0].mxu0 %v521
      %v560 = vpop.f32.mrb[0].mxu0
      %v561 = vadd.f32 0.0, %v560
      %v562 = vpop.f32.mrb[0].mxu0
      %v563 = vpop.f32.mrb[0].mxu0
      %v564 = vpop.f32.mrb[0].mxu0
      %565 = vdwg.mxu0
      %v566 = vsel %vm519, %v561, -inf
      %567 = vmax.xlane.f32.xlu0 %v566
      %v568 = vpop.xlane.xlu0 %567
      %v569 = vsub.f32 %v561, %v568
      %v570 = vmul.f32 %v569, 1.442695
      %v571 = vpow.pop %v570
      %v572 = vsel %vm519, %v571, 0.0
      %573 = vadd.xlane.f32.xlu0 %v572
      %v574 = vpop.xlane.xlu0 %573
      %v575 = vrcp.pop %v574
      %v576 = vmul.f32 %v571, %v575
      %v577 = vpack.c.bf16 %v576, %v576
      %578 = vrot.lane.b32.xlu0 %v515, 64
      %v579 = vpop.permute.xlu0 %578
      %v581 = vsel %vm519, %v577, 0
      %vm583 = vcmask 1043456
      %v585 = vsel %vm583, %v579, 0
      %587 = vmatprep.subr.bf16.mxu0 0
      %588 = vmatpush1.bf16.msra.mxu0 %v585
      %589 = vmatprep.subr.bf16.mxu0 0
      %590 = vmatpush1.bf16.msra.mxu0 0
      %591 = vmatprep.subr.bf16.mxu0 0
      %592 = vmatpush1.bf16.msra.mxu0 0
      %593 = vmatprep.subr.bf16.mxu0 0
      %594 = vmatpush1.bf16.msra.mxu0 0
      %595 = vmatprep.subr.bf16.mxu0 0
      %596 = vmatpush1.bf16.msra.mxu0 0
      %597 = vmatprep.subr.bf16.mxu0 0
      %598 = vmatpush1.bf16.msra.mxu0 0
      %599 = vmatprep.subr.bf16.mxu0 0
      %600 = vmatpush1.bf16.msra.mxu0 0
      %601 = vmatprep.subr.bf16.mxu0 0
      %602 = vmatpush1.bf16.msra.mxu0 0
      %603 = vmatprep.subr.bf16.mxu0 0
      %604 = vmatpush1.bf16.msra.mxu0 0
      %605 = vmatprep.subr.bf16.mxu0 0
      %606 = vmatpush1.bf16.msra.mxu0 0
      %607 = vmatprep.subr.bf16.mxu0 0
      %608 = vmatpush1.bf16.msra.mxu0 0
      %609 = vmatprep.subr.bf16.mxu0 0
      %610 = vmatpush1.bf16.msra.mxu0 0
      %611 = vmatprep.subr.bf16.mxu0 0
      %612 = vmatpush1.bf16.msra.mxu0 0
      %613 = vmatprep.subr.bf16.mxu0 0
      %614 = vmatpush1.bf16.msra.mxu0 0
      %615 = vmatprep.subr.bf16.mxu0 0
      %616 = vmatpush1.bf16.msra.mxu0 0
      %617 = vmatprep.subr.bf16.mxu0 0
      %618 = vmatpush1.bf16.msra.mxu0 0
      %619 = vmatprep.mubr.bf16.mxu0 0
      %620 = vmatmul.mubr.bf16.gmra.mrb[0].mxu0 %v581
      %v621 = vpop.f32.mrb[0].mxu0
      %v622 = vadd.f32 0.0, %v621
      %v623 = vpop.f32.mrb[0].mxu0
      %v624 = vpop.f32.mrb[0].mxu0
      %v625 = vpop.f32.mrb[0].mxu0
      %626 = vdwg.mxu0
      %627 = vrot.lane.b32.xlu0 %v515, 120
      %v628 = vpop.permute.xlu0 %627
      %629 = vrot.lane.b32.xlu0 %v515, 88
      %v630 = vpop.permute.xlu0 %629
      %v632 = vsel %vm519, %v628, 0
      %v635 = vsel %vm519, %v630, 0
      %637 = vmatprep.subr.bf16.mxu0 0
      %638 = vmatpush1.bf16.xpose.msra.mxu0 %v635
      %639 = vmatprep.subr.bf16.mxu0 0
      %640 = vmatpush1.bf16.xpose.msra.mxu0 0
      %641 = vmatprep.subr.bf16.mxu0 0
      %642 = vmatpush1.bf16.xpose.msra.mxu0 0
      %643 = vmatprep.subr.bf16.mxu0 0
      %644 = vmatpush1.bf16.xpose.msra.mxu0 0
      %645 = vmatprep.subr.bf16.mxu0 0
      %646 = vmatpush1.bf16.xpose.msra.mxu0 0
      %647 = vmatprep.subr.bf16.mxu0 0
      %648 = vmatpush1.bf16.xpose.msra.mxu0 0
      %649 = vmatprep.subr.bf16.mxu0 0
      %650 = vmatpush1.bf16.xpose.msra.mxu0 0
      %651 = vmatprep.subr.bf16.mxu0 0
      %652 = vmatpush1.bf16.xpose.msra.mxu0 0
      %653 = vmatprep.subr.bf16.mxu0 0
      %654 = vmatpush1.bf16.xpose.msra.mxu0 0
      %655 = vmatprep.subr.bf16.mxu0 0
      %656 = vmatpush1.bf16.xpose.msra.mxu0 0
      %657 = vmatprep.subr.bf16.mxu0 0
      %658 = vmatpush1.bf16.xpose.msra.mxu0 0
      %659 = vmatprep.subr.bf16.mxu0 0
      %660 = vmatpush1.bf16.xpose.msra.mxu0 0
      %661 = vmatprep.subr.bf16.mxu0 0
      %662 = vmatpush1.bf16.xpose.msra.mxu0 0
      %663 = vmatprep.subr.bf16.mxu0 0
      %664 = vmatpush1.bf16.xpose.msra.mxu0 0
      %665 = vmatprep.subr.bf16.mxu0 0
      %666 = vmatpush1.bf16.xpose.msra.mxu0 0
      %667 = vmatprep.subr.bf16.mxu0 0
      %668 = vmatpush1.bf16.xpose.msra.mxu0 0
      %669 = vmatprep.mubr.bf16.mxu0 0
      %670 = vmatmul.mubr.bf16.gmra.mrb[0].mxu0 %v632
      %v671 = vpop.f32.mrb[0].mxu0
      %v672 = vadd.f32 0.0, %v671
      %v673 = vpop.f32.mrb[0].mxu0
      %v674 = vpop.f32.mrb[0].mxu0
      %v675 = vpop.f32.mrb[0].mxu0
      %676 = vdwg.mxu0
      %v677 = vsel %vm519, %v672, -inf
      %678 = vmax.xlane.f32.xlu0 %v677
      %v679 = vpop.xlane.xlu0 %678
      %v680 = vsub.f32 %v672, %v679
      %v681 = vmul.f32 %v680, 1.442695
      %v682 = vpow.pop %v681
      %v683 = vsel %vm519, %v682, 0.0
      %684 = vadd.xlane.f32.xlu0 %v683
      %v685 = vpop.xlane.xlu0 %684
      %v686 = vrcp.pop %v685
      %v687 = vmul.f32 %v682, %v686
      %v688 = vpack.c.bf16 %v687, %v687
      %689 = vrot.lane.b32.xlu0 %v515, 56
      %v690 = vpop.permute.xlu0 %689
      %v692 = vsel %vm519, %v688, 0
      %v695 = vsel %vm583, %v690, 0
      %697 = vmatprep.subr.bf16.mxu0 0
      %698 = vmatpush1.bf16.msra.mxu0 %v695
      %699 = vmatprep.subr.bf16.mxu0 0
      %700 = vmatpush1.bf16.msra.mxu0 0
      %701 = vmatprep.subr.bf16.mxu0 0
      %702 = vmatpush1.bf16.msra.mxu0 0
      %703 = vmatprep.subr.bf16.mxu0 0
      %704 = vmatpush1.bf16.msra.mxu0 0
      %705 = vmatprep.subr.bf16.mxu0 0
      %706 = vmatpush1.bf16.msra.mxu0 0
      %707 = vmatprep.subr.bf16.mxu0 0
      %708 = vmatpush1.bf16.msra.mxu0 0
      %709 = vmatprep.subr.bf16.mxu0 0
      %710 = vmatpush1.bf16.msra.mxu0 0
      %711 = vmatprep.subr.bf16.mxu0 0
      %712 = vmatpush1.bf16.msra.mxu0 0
      %713 = vmatprep.subr.bf16.mxu0 0
      %714 = vmatpush1.bf16.msra.mxu0 0
      %715 = vmatprep.subr.bf16.mxu0 0
      %716 = vmatpush1.bf16.msra.mxu0 0
      %717 = vmatprep.subr.bf16.mxu0 0
      %718 = vmatpush1.bf16.msra.mxu0 0
      %719 = vmatprep.subr.bf16.mxu0 0
      %720 = vmatpush1.bf16.msra.mxu0 0
      %721 = vmatprep.subr.bf16.mxu0 0
      %722 = vmatpush1.bf16.msra.mxu0 0
      %723 = vmatprep.subr.bf16.mxu0 0
      %724 = vmatpush1.bf16.msra.mxu0 0
      %725 = vmatprep.subr.bf16.mxu0 0
      %726 = vmatpush1.bf16.msra.mxu0 0
      %727 = vmatprep.subr.bf16.mxu0 0
      %728 = vmatpush1.bf16.msra.mxu0 0
      %729 = vmatprep.mubr.bf16.mxu0 0
      %730 = vmatmul.mubr.bf16.gmra.mrb[0].mxu0 %v692
      %v731 = vpop.f32.mrb[0].mxu0
      %v732 = vadd.f32 0.0, %v731
      %v733 = vpop.f32.mrb[0].mxu0
      %v734 = vpop.f32.mrb[0].mxu0
      %v735 = vpop.f32.mrb[0].mxu0
      %736 = vdwg.mxu0
      %737 = vrot.lane.b32.xlu0 %v515, 112
      %v738 = vpop.permute.xlu0 %737
      %739 = vrot.lane.b32.xlu0 %v515, 80
      %v740 = vpop.permute.xlu0 %739
      %v742 = vsel %vm519, %v738, 0
      %v745 = vsel %vm519, %v740, 0
      %747 = vmatprep.subr.bf16.mxu0 0
      %748 = vmatpush1.bf16.xpose.msra.mxu0 %v745
      %749 = vmatprep.subr.bf16.mxu0 0
      %750 = vmatpush1.bf16.xpose.msra.mxu0 0
      %751 = vmatprep.subr.bf16.mxu0 0
      %752 = vmatpush1.bf16.xpose.msra.mxu0 0
      %753 = vmatprep.subr.bf16.mxu0 0
      %754 = vmatpush1.bf16.xpose.msra.mxu0 0
      %755 = vmatprep.subr.bf16.mxu0 0
      %756 = vmatpush1.bf16.xpose.msra.mxu0 0
      %757 = vmatprep.subr.bf16.mxu0 0
      %758 = vmatpush1.bf16.xpose.msra.mxu0 0
      %759 = vmatprep.subr.bf16.mxu0 0
      %760 = vmatpush1.bf16.xpose.msra.mxu0 0
      %761 = vmatprep.subr.bf16.mxu0 0
      %762 = vmatpush1.bf16.xpose.msra.mxu0 0
      %763 = vmatprep.subr.bf16.mxu0 0
      %764 = vmatpush1.bf16.xpose.msra.mxu0 0
      %765 = vmatprep.subr.bf16.mxu0 0
      %766 = vmatpush1.bf16.xpose.msra.mxu0 0
      %767 = vmatprep.subr.bf16.mxu0 0
      %768 = vmatpush1.bf16.xpose.msra.mxu0 0
      %769 = vmatprep.subr.bf16.mxu0 0
      %770 = vmatpush1.bf16.xpose.msra.mxu0 0
      %771 = vmatprep.subr.bf16.mxu0 0
      %772 = vmatpush1.bf16.xpose.msra.mxu0 0
      %773 = vmatprep.subr.bf16.mxu0 0
      %774 = vmatpush1.bf16.xpose.msra.mxu0 0
      %775 = vmatprep.subr.bf16.mxu0 0
      %776 = vmatpush1.bf16.xpose.msra.mxu0 0
      %777 = vmatprep.subr.bf16.mxu0 0
      %778 = vmatpush1.bf16.xpose.msra.mxu0 0
      %779 = vmatprep.mubr.bf16.mxu0 0
      %780 = vmatmul.mubr.bf16.gmra.mrb[0].mxu0 %v742
      %v781 = vpop.f32.mrb[0].mxu0
      %v782 = vadd.f32 0.0, %v781
      %v783 = vpop.f32.mrb[0].mxu0
      %v784 = vpop.f32.mrb[0].mxu0
      %v785 = vpop.f32.mrb[0].mxu0
      %786 = vdwg.mxu0
      %v787 = vsel %vm519, %v782, -inf
      %788 = vmax.xlane.f32.xlu0 %v787
      %v789 = vpop.xlane.xlu0 %788
      %v790 = vsub.f32 %v782, %v789
      %v791 = vmul.f32 %v790, 1.442695
      %v792 = vpow.pop %v791
      %v793 = vsel %vm519, %v792, 0.0
      %794 = vadd.xlane.f32.xlu0 %v793
      %v795 = vpop.xlane.xlu0 %794
      %v796 = vrcp.pop %v795
      %v797 = vmul.f32 %v792, %v796
      %v798 = vpack.c.bf16 %v797, %v797
      %799 = vrot.lane.b32.xlu0 %v515, 48
      %v800 = vpop.permute.xlu0 %799
      %v802 = vsel %vm519, %v798, 0
      %v805 = vsel %vm583, %v800, 0
      %807 = vmatprep.subr.bf16.mxu0 0
      %808 = vmatpush1.bf16.msra.mxu0 %v805
      %809 = vmatprep.subr.bf16.mxu0 0
      %810 = vmatpush1.bf16.msra.mxu0 0
      %811 = vmatprep.subr.bf16.mxu0 0
      %812 = vmatpush1.bf16.msra.mxu0 0
      %813 = vmatprep.subr.bf16.mxu0 0
      %814 = vmatpush1.bf16.msra.mxu0 0
      %815 = vmatprep.subr.bf16.mxu0 0
      %816 = vmatpush1.bf16.msra.mxu0 0
      %817 = vmatprep.subr.bf16.mxu0 0
      %818 = vmatpush1.bf16.msra.mxu0 0
      %819 = vmatprep.subr.bf16.mxu0 0
      %820 = vmatpush1.bf16.msra.mxu0 0
      %821 = vmatprep.subr.bf16.mxu0 0
      %822 = vmatpush1.bf16.msra.mxu0 0
      %823 = vmatprep.subr.bf16.mxu0 0
      %824 = vmatpush1.bf16.msra.mxu0 0
      %825 = vmatprep.subr.bf16.mxu0 0
      %826 = vmatpush1.bf16.msra.mxu0 0
      %827 = vmatprep.subr.bf16.mxu0 0
      %828 = vmatpush1.bf16.msra.mxu0 0
      %829 = vmatprep.subr.bf16.mxu0 0
      %830 = vmatpush1.bf16.msra.mxu0 0
      %831 = vmatprep.subr.bf16.mxu0 0
      %832 = vmatpush1.bf16.msra.mxu0 0
      %833 = vmatprep.subr.bf16.mxu0 0
      %834 = vmatpush1.bf16.msra.mxu0 0
      %835 = vmatprep.subr.bf16.mxu0 0
      %836 = vmatpush1.bf16.msra.mxu0 0
      %837 = vmatprep.subr.bf16.mxu0 0
      %838 = vmatpush1.bf16.msra.mxu0 0
      %839 = vmatprep.mubr.bf16.mxu0 0
      %840 = vmatmul.mubr.bf16.gmra.mrb[0].mxu0 %v802
      %v841 = vpop.f32.mrb[0].mxu0
      %v842 = vadd.f32 0.0, %v841
      %v843 = vpop.f32.mrb[0].mxu0
      %v844 = vpop.f32.mrb[0].mxu0
      %v845 = vpop.f32.mrb[0].mxu0
      %846 = vdwg.mxu0
      %847 = vrot.lane.b32.xlu0 %v515, 104
      %v848 = vpop.permute.xlu0 %847
      %849 = vrot.lane.b32.xlu0 %v515, 72
      %v850 = vpop.permute.xlu0 %849
      %v852 = vsel %vm519, %v848, 0
      %v855 = vsel %vm519, %v850, 0
      %857 = vmatprep.subr.bf16.mxu0 0
      %858 = vmatpush1.bf16.xpose.msra.mxu0 %v855
      %859 = vmatprep.subr.bf16.mxu0 0
      %860 = vmatpush1.bf16.xpose.msra.mxu0 0
      %861 = vmatprep.subr.bf16.mxu0 0
      %862 = vmatpush1.bf16.xpose.msra.mxu0 0
      %863 = vmatprep.subr.bf16.mxu0 0
      %864 = vmatpush1.bf16.xpose.msra.mxu0 0
      %865 = vmatprep.subr.bf16.mxu0 0
      %866 = vmatpush1.bf16.xpose.msra.mxu0 0
      %867 = vmatprep.subr.bf16.mxu0 0
      %868 = vmatpush1.bf16.xpose.msra.mxu0 0
      %869 = vmatprep.subr.bf16.mxu0 0
      %870 = vmatpush1.bf16.xpose.msra.mxu0 0
      %871 = vmatprep.subr.bf16.mxu0 0
      %872 = vmatpush1.bf16.xpose.msra.mxu0 0
      %873 = vmatprep.subr.bf16.mxu0 0
      %874 = vmatpush1.bf16.xpose.msra.mxu0 0
      %875 = vmatprep.subr.bf16.mxu0 0
      %876 = vmatpush1.bf16.xpose.msra.mxu0 0
      %877 = vmatprep.subr.bf16.mxu0 0
      %878 = vmatpush1.bf16.xpose.msra.mxu0 0
      %879 = vmatprep.subr.bf16.mxu0 0
      %880 = vmatpush1.bf16.xpose.msra.mxu0 0
      %881 = vmatprep.subr.bf16.mxu0 0
      %882 = vmatpush1.bf16.xpose.msra.mxu0 0
      %883 = vmatprep.subr.bf16.mxu0 0
      %884 = vmatpush1.bf16.xpose.msra.mxu0 0
      %885 = vmatprep.subr.bf16.mxu0 0
      %886 = vmatpush1.bf16.xpose.msra.mxu0 0
      %887 = vmatprep.subr.bf16.mxu0 0
      %888 = vmatpush1.bf16.xpose.msra.mxu0 0
      %889 = vmatprep.mubr.bf16.mxu0 0
      %890 = vmatmul.mubr.bf16.gmra.mrb[0].mxu0 %v852
      %v891 = vpop.f32.mrb[0].mxu0
      %v892 = vadd.f32 0.0, %v891
      %v893 = vpop.f32.mrb[0].mxu0
      %v894 = vpop.f32.mrb[0].mxu0
      %v895 = vpop.f32.mrb[0].mxu0
      %896 = vdwg.mxu0
      %v897 = vsel %vm519, %v892, -inf
      %898 = vmax.xlane.f32.xlu0 %v897
      %v899 = vpop.xlane.xlu0 %898
      %v900 = vsub.f32 %v892, %v899
      %v901 = vmul.f32 %v900, 1.442695
      %v902 = vpow.pop %v901
      %v903 = vsel %vm519, %v902, 0.0
      %904 = vadd.xlane.f32.xlu0 %v903
      %v905 = vpop.xlane.xlu0 %904
      %v906 = vrcp.pop %v905
      %v907 = vmul.f32 %v902, %v906
      %v908 = vpack.c.bf16 %v907, %v907
      %909 = vrot.lane.b32.xlu0 %v515, 40
      %v910 = vpop.permute.xlu0 %909
      %v912 = vsel %vm519, %v908, 0
      %v915 = vsel %vm583, %v910, 0
      %917 = vmatprep.subr.bf16.mxu0 0
      %918 = vmatpush1.bf16.msra.mxu0 %v915
      %919 = vmatprep.subr.bf16.mxu0 0
      %920 = vmatpush1.bf16.msra.mxu0 0
      %921 = vmatprep.subr.bf16.mxu0 0
      %922 = vmatpush1.bf16.msra.mxu0 0
      %923 = vmatprep.subr.bf16.mxu0 0
      %924 = vmatpush1.bf16.msra.mxu0 0
      %925 = vmatprep.subr.bf16.mxu0 0
      %926 = vmatpush1.bf16.msra.mxu0 0
      %927 = vmatprep.subr.bf16.mxu0 0
      %928 = vmatpush1.bf16.msra.mxu0 0
      %929 = vmatprep.subr.bf16.mxu0 0
      %930 = vmatpush1.bf16.msra.mxu0 0
      %931 = vmatprep.subr.bf16.mxu0 0
      %932 = vmatpush1.bf16.msra.mxu0 0
      %933 = vmatprep.subr.bf16.mxu0 0
      %934 = vmatpush1.bf16.msra.mxu0 0
      %935 = vmatprep.subr.bf16.mxu0 0
      %936 = vmatpush1.bf16.msra.mxu0 0
      %937 = vmatprep.subr.bf16.mxu0 0
      %938 = vmatpush1.bf16.msra.mxu0 0
      %939 = vmatprep.subr.bf16.mxu0 0
      %940 = vmatpush1.bf16.msra.mxu0 0
      %941 = vmatprep.subr.bf16.mxu0 0
      %942 = vmatpush1.bf16.msra.mxu0 0
      %943 = vmatprep.subr.bf16.mxu0 0
      %944 = vmatpush1.bf16.msra.mxu0 0
      %945 = vmatprep.subr.bf16.mxu0 0
      %946 = vmatpush1.bf16.msra.mxu0 0
      %947 = vmatprep.subr.bf16.mxu0 0
      %948 = vmatpush1.bf16.msra.mxu0 0
      %949 = vmatprep.mubr.bf16.mxu0 0
      %950 = vmatmul.mubr.bf16.gmra.mrb[0].mxu0 %v912
      %v951 = vpop.f32.mrb[0].mxu0
      %v952 = vadd.f32 0.0, %v951
      %v953 = vpop.f32.mrb[0].mxu0
      %v954 = vpop.f32.mrb[0].mxu0
      %v955 = vpop.f32.mrb[0].mxu0
      %956 = vdwg.mxu0
      %958 = vrot.lane.b32.xlu0 %v732, 8
      %v959 = vpop.permute.xlu0 %958
      %962 = vrot.lane.b32.xlu0 %v842, 16
      %v963 = vpop.permute.xlu0 %962
      %966 = vrot.lane.b32.xlu0 %v952, 24
      %v967 = vpop.permute.xlu0 %966
      %v969 = vsel %vm519, %v622, %v959
      %vm970 = vcmask 130048
      %v971 = vsel %vm970, %v969, %v963
      %vm972 = vcmask 195584
      %v973 = vsel %vm972, %v971, %v967
      %v974 = vld [vmem:[%s433] sm:$0x3f]
      %v975 = vld [vmem:[%s416] sm:$0xf]
      %v976 = vld [vmem:[%s416 + $0x4] sm:$0xf]
      %v977 = vld [vmem:[%s416 + $0x8] sm:$0xf]
      %v978 = vld [vmem:[%s416 + $0xc] sm:$0xf]
      %v979 = vpack.c.bf16 %v973, %v973
      %v980 = vlaneseq
      %v981 = vshrl.u32 %v980, 7
      %v982 = vsub.s32 0, %v981
      %v983 = vrot.slane %v974, %v982
      %v988 = vunpack.c.l.b16 %v975
      %v989 = vunpack.c.l.b16 %v976
      %v990 = vunpack.c.l.b16 %v977
      %v991 = vunpack.c.l.b16 %v978
      %v992 = vpack.c.b16 %v989, %v988
      %v993 = vpack.c.b16 %v991, %v990
      %v997 = vsel %vm471, %v979, 0
      %999 = vmatprep.subr.bf16.mxu0 0
      %1000 = vmatpush1.bf16.msra.mxu0 %v992
      %1001 = vmatprep.subr.bf16.mxu0 0
      %1002 = vmatpush1.bf16.msra.mxu0 %v993
      %1003 = vmatprep.subr.bf16.mxu0 0
      %1004 = vmatpush1.bf16.msra.mxu0 0
      %1005 = vmatprep.subr.bf16.mxu0 0
      %1006 = vmatpush1.bf16.msra.mxu0 0
      %1007 = vmatprep.subr.bf16.mxu0 0
      %1008 = vmatpush1.bf16.msra.mxu0 0
      %1009 = vmatprep.subr.bf16.mxu0 0
      %1010 = vmatpush1.bf16.msra.mxu0 0
      %1011 = vmatprep.subr.bf16.mxu0 0
      %1012 = vmatpush1.bf16.msra.mxu0 0
      %1013 = vmatprep.subr.bf16.mxu0 0
      %1014 = vmatpush1.bf16.msra.mxu0 0
      %1015 = vmatprep.subr.bf16.mxu0 0
      %1016 = vmatpush1.bf16.msra.mxu0 0
      %1017 = vmatprep.subr.bf16.mxu0 0
      %1018 = vmatpush1.bf16.msra.mxu0 0
      %1019 = vmatprep.subr.bf16.mxu0 0
      %1020 = vmatpush1.bf16.msra.mxu0 0
      %1021 = vmatprep.subr.bf16.mxu0 0
      %1022 = vmatpush1.bf16.msra.mxu0 0
      %1023 = vmatprep.subr.bf16.mxu0 0
      %1024 = vmatpush1.bf16.msra.mxu0 0
      %1025 = vmatprep.subr.bf16.mxu0 0
      %1026 = vmatpush1.bf16.msra.mxu0 0
      %1027 = vmatprep.subr.bf16.mxu0 0
      %1028 = vmatpush1.bf16.msra.mxu0 0
      %1029 = vmatprep.subr.bf16.mxu0 0
      %1030 = vmatpush1.bf16.msra.mxu0 0
      %1031 = vmatprep.mubr.bf16.mxu0 0
      %1032 = vmatmul.mubr.bf16.gmra.mrb[0].mxu0 %v997
      %v1033 = vpop.f32.mrb[0].mxu0
      %v1034 = vadd.f32 %v983, %v1033
      %v1035 = vpop.f32.mrb[0].mxu0
      %v1036 = vpop.f32.mrb[0].mxu0
      %v1037 = vpop.f32.mrb[0].mxu0
      %1038 = vdwg.mxu0
      %v1039 = vadd.f32 %v446, %v1034
      %v1040 = vsel %vm471, %v1039, 0.0
      %1041 = vadd.xlane.f32.xlu0 %v1040
      %v1042 = vpop.xlane.xlu0 %1041
      %v1043 = vrcp.pop 32.0
      %v1044 = vmul.f32 %v1042, %v1043
      %v1045 = vsub.f32 %v1039, %v1044
      %v1046 = vmul.f32 %v1045, %v1045
      %v1047 = vsel %vm471, %v1046, 0.0
      %1048 = vadd.xlane.f32.xlu0 %v1047
      %v1049 = vpop.xlane.xlu0 %1048
      %v1050 = vmul.f32 %v1049, %v1043
      %v1051 = vadd.f32 %v1050, 1e-05
      %v1052 = vrsqrt.pop %v1051
      %v1053 = vmul.f32 %v1045, %v1052
      %v1054 = vlaneseq
      %v1055 = vshrl.u32 %v1054, 7
      %v1056 = vsub.s32 2, %v1055
      %v1057 = vrot.slane %v974, %v1056
      %v1058 = vmul.f32 %v1053, %v1057
      %v1059 = vlaneseq
      %v1060 = vshrl.u32 %v1059, 7
      %v1061 = vsub.s32 3, %v1060
      %v1062 = vrot.slane %v974, %v1061
      %v1063 = vadd.f32 %v1058, %v1062
      %v1064 = vld [vmem:[%s421] sm:$0xf]
      %v1065 = vld [vmem:[%s421 + $0x4] sm:$0xf]
      %v1066 = vld [vmem:[%s421 + $0x8] sm:$0xf]
      %v1067 = vld [vmem:[%s421 + $0xc] sm:$0xf]
      %v1068 = vpack.c.bf16 %v1063, %v1063
      %v1069 = vld [vmem:[%s424] sm:$0x1]
      %v1071 = vlaneseq
      %v1072 = vshrl.u32 %v1071, 7
      %v1073 = vsub.s32 0, %v1072
      %v1074 = vrot.slane %v1069, %v1073
      %v1080 = vunpack.c.l.b16 %v1064
      %v1081 = vunpack.c.l.b16 %v1065
      %v1082 = vunpack.c.l.b16 %v1066
      %v1083 = vunpack.c.l.b16 %v1067
      %v1084 = vpack.c.b16 %v1081, %v1080
      %v1085 = vpack.c.b16 %v1083, %v1082
      %v1089 = vsel %vm471, %v1068, 0
      %1091 = vmatprep.subr.bf16.mxu0 0
      %1092 = vmatpush1.bf16.msra.mxu0 %v1084
      %1093 = vmatprep.subr.bf16.mxu0 0
      %1094 = vmatpush1.bf16.msra.mxu0 %v1085
      %1095 = vmatprep.subr.bf16.mxu0 0
      %1096 = vmatpush1.bf16.msra.mxu0 0
      %1097 = vmatprep.subr.bf16.mxu0 0
      %1098 = vmatpush1.bf16.msra.mxu0 0
      %1099 = vmatprep.subr.bf16.mxu0 0
      %1100 = vmatpush1.bf16.msra.mxu0 0
      %1101 = vmatprep.subr.bf16.mxu0 0
      %1102 = vmatpush1.bf16.msra.mxu0 0
      %1103 = vmatprep.subr.bf16.mxu0 0
      %1104 = vmatpush1.bf16.msra.mxu0 0
      %1105 = vmatprep.subr.bf16.mxu0 0
      %1106 = vmatpush1.bf16.msra.mxu0 0
      %1107 = vmatprep.subr.bf16.mxu0 0
      %1108 = vmatpush1.bf16.msra.mxu0 0
      %1109 = vmatprep.subr.bf16.mxu0 0
      %1110 = vmatpush1.bf16.msra.mxu0 0
      %1111 = vmatprep.subr.bf16.mxu0 0
      %1112 = vmatpush1.bf16.msra.mxu0 0
      %1113 = vmatprep.subr.bf16.mxu0 0
      %1114 = vmatpush1.bf16.msra.mxu0 0
      %1115 = vmatprep.subr.bf16.mxu0 0
      %1116 = vmatpush1.bf16.msra.mxu0 0
      %1117 = vmatprep.subr.bf16.mxu0 0
      %1118 = vmatpush1.bf16.msra.mxu0 0
      %1119 = vmatprep.subr.bf16.mxu0 0
      %1120 = vmatpush1.bf16.msra.mxu0 0
      %1121 = vmatprep.subr.bf16.mxu0 0
      %1122 = vmatpush1.bf16.msra.mxu0 0
      %1123 = vmatprep.mubr.bf16.mxu0 0
      %1124 = vmatmul.mubr.bf16.gmra.mrb[0].mxu0 %v1089
      %v1125 = vpop.f32.mrb[0].mxu0
      %v1126 = vadd.f32 %v1074, %v1125
      %v1127 = vpop.f32.mrb[0].mxu0
      %v1128 = vpop.f32.mrb[0].mxu0
      %v1129 = vpop.f32.mrb[0].mxu0
      %1130 = vdwg.mxu0
      %v1131 = vmax.f32 %v1126, 0.0
      %v1132 = vld [vmem:[%s429] sm:$0xf]
      %v1133 = vld [vmem:[%s429 + $0x4] sm:$0xf]
      %v1134 = vld [vmem:[%s429 + $0x8] sm:$0xf]
      %v1135 = vld [vmem:[%s429 + $0xc] sm:$0xf]
      %v1136 = vld [vmem:[%s429 + $0x10] sm:$0xf]
      %v1137 = vld [vmem:[%s429 + $0x14] sm:$0xf]
      %v1138 = vld [vmem:[%s429 + $0x18] sm:$0xf]
      %v1139 = vld [vmem:[%s429 + $0x1c] sm:$0xf]
      %v1140 = vpack.c.bf16 %v1131, %v1131
      %v1141 = vlaneseq
      %v1142 = vshrl.u32 %v1141, 7
      %v1143 = vsub.s32 1, %v1142
      %v1144 = vrot.slane %v974, %v1143
      %v1153 = vunpack.c.l.b16 %v1132
      %v1154 = vunpack.c.l.b16 %v1133
      %v1155 = vunpack.c.l.b16 %v1134
      %v1156 = vunpack.c.l.b16 %v1135
      %v1157 = vunpack.c.l.b16 %v1136
      %v1158 = vunpack.c.l.b16 %v1137
      %v1159 = vunpack.c.l.b16 %v1138
      %v1160 = vunpack.c.l.b16 %v1139
      %v1161 = vpack.c.b16 %v1154, %v1153
      %v1162 = vpack.c.b16 %v1156, %v1155
      %v1163 = vpack.c.b16 %v1158, %v1157
      %v1164 = vpack.c.b16 %v1160, %v1159
      %vm1169 = vcmask 523264
      %v1171 = vsel %vm1169, %v1140, 0
      %1173 = vmatprep.subr.bf16.mxu0 0
      %1174 = vmatpush1.bf16.msra.mxu0 %v1161
      %1175 = vmatprep.subr.bf16.mxu0 0
      %1176 = vmatpush1.bf16.msra.mxu0 %v1162
      %1177 = vmatprep.subr.bf16.mxu0 0
      %1178 = vmatpush1.bf16.msra.mxu0 %v1163
      %1179 = vmatprep.subr.bf16.mxu0 0
      %1180 = vmatpush1.bf16.msra.mxu0 %v1164
      %1181 = vmatprep.subr.bf16.mxu0 0
      %1182 = vmatpush1.bf16.msra.mxu0 0
      %1183 = vmatprep.subr.bf16.mxu0 0
      %1184 = vmatpush1.bf16.msra.mxu0 0
      %1185 = vmatprep.subr.bf16.mxu0 0
      %1186 = vmatpush1.bf16.msra.mxu0 0
      %1187 = vmatprep.subr.bf16.mxu0 0
      %1188 = vmatpush1.bf16.msra.mxu0 0
      %1189 = vmatprep.subr.bf16.mxu0 0
      %1190 = vmatpush1.bf16.msra.mxu0 0
      %1191 = vmatprep.subr.bf16.mxu0 0
      %1192 = vmatpush1.bf16.msra.mxu0 0
      %1193 = vmatprep.subr.bf16.mxu0 0
      %1194 = vmatpush1.bf16.msra.mxu0 0
      %1195 = vmatprep.subr.bf16.mxu0 0
      %1196 = vmatpush1.bf16.msra.mxu0 0
      %1197 = vmatprep.subr.bf16.mxu0 0
      %1198 = vmatpush1.bf16.msra.mxu0 0
      %1199 = vmatprep.subr.bf16.mxu0 0
      %1200 = vmatpush1.bf16.msra.mxu0 0
      %1201 = vmatprep.subr.bf16.mxu0 0
      %1202 = vmatpush1.bf16.msra.mxu0 0
      %1203 = vmatprep.subr.bf16.mxu0 0
      %1204 = vmatpush1.bf16.msra.mxu0 0
      %1205 = vmatprep.mubr.bf16.mxu0 0
      %1206 = vmatmul.mubr.bf16.gmra.mrb[0].mxu0 %v1171
      %v1207 = vpop.f32.mrb[0].mxu0
      %v1208 = vadd.f32 %v1144, %v1207
      %v1209 = vpop.f32.mrb[0].mxu0
      %v1210 = vpop.f32.mrb[0].mxu0
      %v1211 = vpop.f32.mrb[0].mxu0
      %1212 = vdwg.mxu0
      %v1213 = vadd.f32 %v1063, %v1208
      %v1214 = vsel %vm471, %v1213, 0.0
      %1215 = vadd.xlane.f32.xlu0 %v1214
      %v1216 = vpop.xlane.xlu0 %1215
      %v1217 = vmul.f32 %v1216, %v1043
      %v1218 = vsub.f32 %v1213, %v1217
      %v1219 = vmul.f32 %v1218, %v1218
      %v1220 = vsel %vm471, %v1219, 0.0
      %1221 = vadd.xlane.f32.xlu0 %v1220
      %v1222 = vpop.xlane.xlu0 %1221
      %v1223 = vmul.f32 %v1222, %v1043
      %v1224 = vadd.f32 %v1223, 1e-05
      %v1225 = vrsqrt.pop %v1224
      %v1226 = vmul.f32 %v1218, %v1225
      %v1227 = vlaneseq
      %v1228 = vshrl.u32 %v1227, 7
      %v1229 = vsub.s32 4, %v1228
      %v1230 = vrot.slane %v974, %v1229
      %v1231 = vmul.f32 %v1226, %v1230
      %v1232 = vlaneseq
      %v1233 = vshrl.u32 %v1232, 7
      %v1234 = vsub.s32 5, %v1233
      %v1235 = vrot.slane %v974, %v1234
      %v1236 = vadd.f32 %v1231, %v1235
      %1237 = vst.msk [vmem:[#allocation2] sm:$0xff] %vm471, %v1236
      %p1238 = scmp.eq.s32.totalorder %s24, 1
      // Predicated region
      $region57: #{transformer_autoencoder_forward.4} parent=51 // pred_check
        %p1239 = pneg %p1238
      $region58: #{transformer_autoencoder_forward.4} parent=51 // pred_check_branch
        %1241 = sbr.rel (%p1239) target = $region60
      $region59: #{transformer_autoencoder_forward.4} parent=51 // pred_region
        %1242 = vst.msk [vmem:[%s437] sm:$0xff] %vm471, %v1236
      $region60: #{transformer_autoencoder_forward.4} parent=51 // pred_fallthru
        _
      %p1243 = scmp.lt.s32.totalorder %s23, 1
      %s1244 = scalar_select %p1243, %s23, 1
      %s1245 = smul.addr %s1244, 8
      %s1246 = scalar_lea.vmem %s8, %s1245
      // Predicated region
      $region61: #{transformer_autoencoder_forward.4} parent=51 // pred_check
        %p1247 = pneg %p257
      $region62: #{transformer_autoencoder_forward.4} parent=51 // pred_check_branch
        %1249 = sbr.rel (%p1247) target = $region64
      $region63: #{transformer_autoencoder_forward.4} parent=51 // pred_region
        _
      $region64: #{transformer_autoencoder_forward.4} parent=51 // pred_fallthru
        _
    $region52: #{transformer_autoencoder_forward.4} parent=5 // pred_fallthru
      _
    %p1250 = scmp.le.s32.totalorder 2, %s14
    // Predicated region
    $region65: #{transformer_autoencoder_forward.4} parent=5 // pred_check
      %p1251 = pneg %p1250
    $region66: #{transformer_autoencoder_forward.4} parent=5 // pred_check_branch
      %1253 = sbr.rel (%p1251) target = $region68
    $region67: #{transformer_autoencoder_forward.4} parent=5 // pred_region
      %s1254 = ssub.s32 %s14, 2
      // Predicated region
      $region69: #{transformer_autoencoder_forward.4} parent=67 // pred_check
        %p1255 = pneg %p263
      $region70: #{transformer_autoencoder_forward.4} parent=67 // pred_check_branch
        %1257 = sbr.rel (%p1255) target = $region72
      $region71: #{transformer_autoencoder_forward.4} parent=67 // pred_region
        %p1258 = scmp.lt.s32.totalorder %s25, 1
        %s1259 = scalar_select %p1258, %s25, 1
        %s1260 = smul.addr %s1259, 8
        %s1261 = scalar_lea.vmem %s8, %s1260
      $region72: #{transformer_autoencoder_forward.4} parent=67 // pred_fallthru
        _
    $region68: #{transformer_autoencoder_forward.4} parent=5 // pred_fallthru
      _
  $region6: #{transformer_autoencoder_forward.4} parent=0 // loop_footer
    %s18 = sadd.s32 1, %s14
  $region7: #{transformer_autoencoder_forward.4} parent=0 // loop_footer_branch
    %13 = sbr.rel target = $region3
  $region8: #{transformer_autoencoder_forward.4} parent=0 // loop_exit
    _

</llo_original>
